<compile_context>
chip_gen: v7x
topology: tpu7x:2x2x1
jax: 0.10.0
libtpu: 0.0.40
codegen_flags: <defaults>
</compile_context>

<pallas_src>
import functools

import jax
import jax.numpy as jnp
from jax.experimental import pallas as pl
from jax.experimental.pallas import tpu as pltpu

LANE = 128
DEFAULT_TK = 256  # use 128 on v5e (4x128 MXU)


def _round_up(v, m):
    return (v + m - 1) // m * m


# ---------------------------------------------------------------------------
# Fused 2-layer GCN forward kernel.
#
# Grid = (2, Kt):
#   phase 0 : h  += A[:, k-tile] @ (X[k-tile] @ W1)     (layer-1 reduction, f32)
#             at k == last:  h = relu(h + b1)           (stays resident in VMEM)
#   phase 1 : out += A[:, k-tile] @ (H[k-tile] @ W2)    (layer-2 reduction, f32,
#                                                        directly into o_ref)
#             at k == last:  out = log_softmax(mask(out + b2))   (in place)
#
# Both grid axes are sequential ("arbitrary"): phase 1 depends on the full H,
# so the row axis cannot be megacore-parallel in this fused form.
# ---------------------------------------------------------------------------
def fused_gcn2_kernel(x_ref, adj_ref, w1_ref, b1_ref, w2_ref, b2_ref,
                      o_ref, h_ref, *, nclass, tk):
    phase = pl.program_id(0)
    k = pl.program_id(1)
    nk = pl.num_programs(1)

    # Reset the phase accumulators at the start of each phase's reduction.
    @pl.when((phase == 0) & (k == 0))
    def _():
        h_ref[...] = jnp.zeros_like(h_ref)

    @pl.when((phase == 1) & (k == 0))
    def _():
        o_ref[...] = jnp.zeros_like(o_ref)

    a_tile = adj_ref[...]  # (n_pad, tk) bf16 adjacency column tile

    @pl.when(phase == 0)
    def _():
        # support for this k-tile: X[k-tile] @ W1  (computed exactly once per tile)
        sup = jnp.dot(x_ref[...], w1_ref[...],
                      preferred_element_type=jnp.float32)
        h_ref[...] += jnp.dot(a_tile, sup.astype(jnp.bfloat16),
                              preferred_element_type=jnp.float32)

    @pl.when(phase == 1)
    def _():
        start = pl.multiple_of(k * tk, tk)
        # resident f32 hidden activations, cast to bf16 per tile for the MXU
        h_tile = h_ref[pl.ds(start, tk), :].astype(jnp.bfloat16)
        sup = jnp.dot(h_tile, w2_ref[...],
                      preferred_element_type=jnp.float32)
        o_ref[...] += jnp.dot(a_tile, sup.astype(jnp.bfloat16),
                              preferred_element_type=jnp.float32)

    # End of layer 1: bias + ReLU (f32), keep resident in VMEM.
    @pl.when((phase == 0) & (k == nk - 1))
    def _():
        h_ref[...] = jnp.maximum(h_ref[...] + b1_ref[...], 0.0)

    # End of layer 2: bias + masked, numerically-stable log_softmax, in place.
    @pl.when((phase == 1) & (k == nk - 1))
    def _():
        logits = o_ref[...] + b2_ref[...]
        col = jax.lax.broadcasted_iota(jnp.int32, logits.shape, 1)
        logits = jnp.where(col < nclass, logits, -1e30)  # padded class columns
        m = jnp.max(logits, axis=1, keepdims=True)
        s = logits - m
        lse = jnp.log(jnp.sum(jnp.exp(s), axis=1, keepdims=True))
        o_ref[...] = s - lse


def prepare_adjacency(adj, *, tk=DEFAULT_TK):
    """Pad + cast the dense normalized adjacency once; cache across forwards."""
    n = adj.shape[0]
    n_pad = _round_up(max(n, tk), tk)
    return jnp.zeros((n_pad, n_pad), jnp.bfloat16).at[:n, :n].set(
        adj.astype(jnp.bfloat16))


def gcn_forward(x, adj, params, *, tk=DEFAULT_TK):
    """Fused 2-layer GCN forward (eval mode: dropout identity, no BN).

    `adj` may be either the raw [N, N] normalized adjacency or the padded bf16
    array returned by prepare_adjacency (preferred when called repeatedly).
    """
    assert len(params) == 2, "fused kernel implements the nlayers=2 default"
    (w1, b1), (w2, b2) = params
    n, nfeat = x.shape
    nhid = w1.shape[1]
    nclass = w2.shape[1]

    n_pad = _round_up(max(n, tk), tk)
    f_pad = _round_up(nfeat, LANE)
    fh = _round_up(nhid, LANE)    # layer-1 lane width
    fc = _round_up(nclass, LANE)  # layer-2 lane width

    # Zero-padded, bf16 MXU operands (zero padding is exact: contributes nothing).
    x_p = jnp.zeros((n_pad, f_pad), jnp.bfloat16).at[:n, :nfeat].set(
        x.astype(jnp.bfloat16))
    if adj.dtype == jnp.bfloat16 and adj.shape == (n_pad, n_pad):
        adj_p = adj                          # already prepared / hoisted
    else:
        adj_p = prepare_adjacency(adj, tk=tk)
    w1_p = jnp.zeros((f_pad, fh), jnp.bfloat16).at[:nfeat, :nhid].set(
        w1.astype(jnp.bfloat16))
    w2_p = jnp.zeros((fh, fc), jnp.bfloat16).at[:nhid, :nclass].set(
        w2.astype(jnp.bfloat16))
    b1_p = jnp.zeros((1, fh), jnp.float32).at[0, :nhid].set(b1.astype(jnp.float32))
    b2_p = jnp.zeros((1, fc), jnp.float32).at[0, :nclass].set(b2.astype(jnp.float32))

    nk = n_pad // tk
    kernel = functools.partial(fused_gcn2_kernel, nclass=nclass, tk=tk)

    # VMEM budget: resident H (f32) + resident output (f32) + double-buffered
    # adjacency / X tiles + weights/biases, with headroom.
    vmem_bytes = (
        n_pad * fh * 4                    # resident hidden / phase-0 accumulator
        + 2 * n_pad * fc * 4              # resident output (phase-1 accumulator)
        + 2 * n_pad * tk * 2              # adjacency column tile, double-buffered
        + 2 * tk * f_pad * 2              # X row tile, double-buffered
        + 2 * (f_pad * fh + fh * fc) * 2  # weights
        + 2 * (fh + fc) * 4               # biases
    )
    vmem_limit = int(min(vmem_bytes * 1.25 + (4 << 20), 128 << 20))

    # Advisory cost estimate for XLA scheduling around the custom call.
    flops = (2 * n_pad * f_pad * fh          # X @ W1
             + 2 * n_pad * n_pad * fh        # A @ sup1
             + 2 * n_pad * fh * fc           # H @ W2
             + 2 * n_pad * n_pad * fc)       # A @ sup2
    bytes_accessed = (adj_p.size * 2 * 2     # adjacency streamed twice, bf16
                      + x_p.size * 2 + w1_p.size * 2 + w2_p.size * 2
                      + (b1_p.size + b2_p.size) * 4
                      + n_pad * fc * 4)      # output store
    cost = pl.CostEstimate(flops=flops,
                           transcendentals=n_pad * fc,
                           bytes_accessed=bytes_accessed)

    out_p = pl.pallas_call(
        kernel,
        out_shape=jax.ShapeDtypeStruct((n_pad, fc), jnp.float32),
        grid_spec=pltpu.PrefetchScalarGridSpec(
            num_scalar_prefetch=0,
            grid=(2, nk),                                     # (phase, k) — k last
            in_specs=[
                # X row tile: streams with k in phase 0, pinned (no re-DMA) in phase 1
                pl.BlockSpec((tk, f_pad), lambda p, k: (k * (1 - p), 0)),
                pl.BlockSpec((n_pad, tk), lambda p, k: (0, k)),    # adj column tile
                pl.BlockSpec((f_pad, fh), lambda p, k: (0, 0)),    # W1
                pl.BlockSpec((1, fh), lambda p, k: (0, 0)),        # b1
                pl.BlockSpec((fh, fc), lambda p, k: (0, 0)),       # W2
                pl.BlockSpec((1, fc), lambda p, k: (0, 0)),        # b2
            ],
            out_specs=pl.BlockSpec((n_pad, fc), lambda p, k: (0, 0)),
            scratch_shapes=[
                pltpu.VMEM((n_pad, fh), jnp.float32),  # hidden acts / phase-0 acc
            ],
        ),
        compiler_params=pltpu.CompilerParams(
            dimension_semantics=("arbitrary", "arbitrary"),
            vmem_limit_bytes=vmem_limit,
        ),
        cost_estimate=cost,
    )(x_p, adj_p, w1_p, b1_p, w2_p, b2_p)

    return out_p[:n, :nclass]


# ---------------------------------------------------------------------------
# Deterministic parameter init (glorot for weights, zeros for bias)
# ---------------------------------------------------------------------------
def glorot_uniform(key, fan_in, fan_out):
    limit = (6.0 / (fan_in + fan_out)) ** 0.5
    return jax.random.uniform(key, (fan_in, fan_out), dtype=jnp.float32,
                              minval=-limit, maxval=limit)


def init_gcn_params(key, nfeat, nhid, nclass, nlayers=2):
    dims = [nfeat] + [nhid] * (nlayers - 1) + [nclass]
    params = []
    for i in range(nlayers):
        key, sub = jax.random.split(key)
        w = glorot_uniform(sub, dims[i], dims[i + 1])
        b = jnp.zeros((dims[i + 1],), dtype=jnp.float32)
        params.append((w, b))
    return params


# Pure-JAX reference with the same bf16-operand / f32-accumulation scheme.
def reference_forward(x, adj, params):
    (w1, b1), (w2, b2) = params
    xb = x.astype(jnp.bfloat16)
    ab = adj.astype(jnp.bfloat16)
    sup1 = jnp.dot(xb, w1.astype(jnp.bfloat16), preferred_element_type=jnp.float32)
    h = jnp.dot(ab, sup1.astype(jnp.bfloat16),
                preferred_element_type=jnp.float32) + b1
    h = jnp.maximum(h, 0.0).astype(jnp.bfloat16)
    sup2 = jnp.dot(h, w2.astype(jnp.bfloat16), preferred_element_type=jnp.float32)
    logits = jnp.dot(ab, sup2.astype(jnp.bfloat16),
                     preferred_element_type=jnp.float32) + b2
    return jax.nn.log_softmax(logits, axis=1)


if __name__ == "__main__":
    key = jax.random.PRNGKey(0)

    # Small graph: N nodes, nfeat input features, nhid hidden, nclass classes.
    N, nfeat, nhid, nclass = 256, 32, 32, 8
    k_x, k_adj, k_params = jax.random.split(key, 3)

    x = jax.random.normal(k_x, (N, nfeat), dtype=jnp.float32)

    # Dense symmetric adjacency with self-loops, symmetric-normalized
    # (stand-in for normalize_adj_tensor; any dense [N, N] works for the kernel).
    a = (jax.random.uniform(k_adj, (N, N)) > 0.9).astype(jnp.float32)
    a = jnp.maximum(a, a.T) + jnp.eye(N, dtype=jnp.float32)
    deg = jnp.sum(a, axis=1)
    d_inv_sqrt = 1.0 / jnp.sqrt(deg)
    adj = a * d_inv_sqrt[:, None] * d_inv_sqrt[None, :]

    params = init_gcn_params(k_params, nfeat, nhid, nclass, nlayers=2)

    # Hoist adjacency pad/cast out of the per-call path (cache across forwards).
    adj_prepared = prepare_adjacency(adj, tk=DEFAULT_TK)

    out = jax.block_until_ready(gcn_forward(x, adj_prepared, params))

    ref = reference_forward(x, adj, params)
    assert out.shape == (N, nclass)
    max_err = float(jnp.max(jnp.abs(out - ref)))
    assert jnp.allclose(out, ref, atol=1e-2, rtol=1e-2), max_err

    print("KERNEL_OK")
</pallas_src>

<mosaic_0001>
module attributes {stable_mosaic.version = 11 : i64} {
  func.func @fused_gcn2_kernel(%arg0: i32, %arg1: i32, %arg2: memref<256x128xbf16, #tpu.memory_space<vmem>>, %arg3: memref<256x256xbf16, #tpu.memory_space<vmem>>, %arg4: memref<128x128xbf16, #tpu.memory_space<vmem>>, %arg5: memref<1x128xf32, #tpu.memory_space<vmem>>, %arg6: memref<128x128xbf16, #tpu.memory_space<vmem>>, %arg7: memref<1x128xf32, #tpu.memory_space<vmem>>, %arg8: memref<256x128xf32, #tpu.memory_space<vmem>>, %arg9: memref<256x128xf32, #tpu.memory_space<vmem>>) attributes {dimension_semantics = [#tpu.dimension_semantics<arbitrary>, #tpu.dimension_semantics<arbitrary>], iteration_bounds = array<i64: 2, 1>, scalar_prefetch = 0 : i64, scratch_operands = 1 : i64, tpu.core_type = #tpu.core_type<tc>, window_params = [{transform_indices = @transform_0, window_bounds = array<i64: 256, 128>}, {transform_indices = @transform_1, window_bounds = array<i64: 256, 256>}, {pipeline_mode = #tpu.pipeline_mode<synchronous>, transform_indices = @transform_2, window_bounds = array<i64: 128, 128>}, {pipeline_mode = #tpu.pipeline_mode<synchronous>, transform_indices = @transform_3, window_bounds = array<i64: 1, 128>}, {pipeline_mode = #tpu.pipeline_mode<synchronous>, transform_indices = @transform_4, window_bounds = array<i64: 128, 128>}, {pipeline_mode = #tpu.pipeline_mode<synchronous>, transform_indices = @transform_5, window_bounds = array<i64: 1, 128>}, {pipeline_mode = #tpu.pipeline_mode<synchronous>, transform_indices = @transform_6, window_bounds = array<i64: 256, 128>}]} {
    %c0_i32 = arith.constant 0 : i32
    %0 = arith.cmpi eq, %arg0, %c0_i32 : i32
    %c0_i32_0 = arith.constant 0 : i32
    %1 = arith.cmpi eq, %arg1, %c0_i32_0 : i32
    %2 = arith.andi %0, %1 : i1
    %3 = arith.extui %2 : i1 to i32
    %c0_i32_1 = arith.constant 0 : i32
    %4 = arith.cmpi ne, %3, %c0_i32_1 : i32
    scf.if %4 {
      %cst = arith.constant 0.000000e+00 : f32
      %27 = vector.broadcast %cst : f32 to vector<256x128xf32>
      %c0_15 = arith.constant 0 : index
      %c0_16 = arith.constant 0 : index
      %28 = vector.load %arg9[%c0_15, %c0_16] : memref<256x128xf32, #tpu.memory_space<vmem>>, vector<256x128xf32>
      tpu.vector_store %arg9[%c0_15, %c0_16], %27 {strides = array<i32>} : memref<256x128xf32, #tpu.memory_space<vmem>>, vector<256x128xf32>,
    } else {
    }
    %c1_i32 = arith.constant 1 : i32
    %5 = arith.cmpi eq, %arg0, %c1_i32 : i32
    %c0_i32_2 = arith.constant 0 : i32
    %6 = arith.cmpi eq, %arg1, %c0_i32_2 : i32
    %7 = arith.andi %5, %6 : i1
    %8 = arith.extui %7 : i1 to i32
    %c0_i32_3 = arith.constant 0 : i32
    %9 = arith.cmpi ne, %8, %c0_i32_3 : i32
    scf.if %9 {
      %cst = arith.constant 0.000000e+00 : f32
      %27 = vector.broadcast %cst : f32 to vector<256x128xf32>
      %c0_15 = arith.constant 0 : index
      %c0_16 = arith.constant 0 : index
      %28 = vector.load %arg8[%c0_15, %c0_16] : memref<256x128xf32, #tpu.memory_space<vmem>>, vector<256x128xf32>
      tpu.vector_store %arg8[%c0_15, %c0_16], %27 {strides = array<i32>} : memref<256x128xf32, #tpu.memory_space<vmem>>, vector<256x128xf32>,
    } else {
    }
    %c0 = arith.constant 0 : index
    %c0_4 = arith.constant 0 : index
    %10 = vector.load %arg3[%c0, %c0_4] : memref<256x256xbf16, #tpu.memory_space<vmem>>, vector<256x256xbf16>
    %c0_i32_5 = arith.constant 0 : i32
    %11 = arith.cmpi eq, %arg0, %c0_i32_5 : i32
    %12 = arith.extui %11 : i1 to i32
    %c0_i32_6 = arith.constant 0 : i32
    %13 = arith.cmpi ne, %12, %c0_i32_6 : i32
    scf.if %13 {
      %c0_15 = arith.constant 0 : index
      %c0_16 = arith.constant 0 : index
      %27 = vector.load %arg2[%c0_15, %c0_16] : memref<256x128xbf16, #tpu.memory_space<vmem>>, vector<256x128xbf16>
      %c0_17 = arith.constant 0 : index
      %c0_18 = arith.constant 0 : index
      %28 = vector.load %arg4[%c0_17, %c0_18] : memref<128x128xbf16, #tpu.memory_space<vmem>>, vector<128x128xbf16>
      %cst = arith.constant dense<0.000000e+00> : vector<256x128xf32>
      %29 = tpu.matmul %27, %28, %cst {dimension_numbers = #tpu.dot_dimension_numbers<[1], [0], [0], [1], [0, 0, 1, 1], [], []>} : vector<256x128xbf16>, vector<128x128xbf16>, vector<256x128xf32> -> vector<256x128xf32>
      %c0_19 = arith.constant 0 : index
      %c0_20 = arith.constant 0 : index
      %30 = vector.load %arg9[%c0_19, %c0_20] : memref<256x128xf32, #tpu.memory_space<vmem>>, vector<256x128xf32>
      %31 = arith.truncf %29 : vector<256x128xf32> to vector<256x128xbf16>
      %cst_21 = arith.constant dense<0.000000e+00> : vector<256x128xf32>
      %32 = tpu.matmul %10, %31, %cst_21 {dimension_numbers = #tpu.dot_dimension_numbers<[1], [0], [0], [1], [0, 0, 1, 1], [], []>} : vector<256x256xbf16>, vector<256x128xbf16>, vector<256x128xf32> -> vector<256x128xf32>
      %33 = arith.addf %30, %32 : vector<256x128xf32>
      %c0_22 = arith.constant 0 : index
      %c0_23 = arith.constant 0 : index
      %34 = vector.load %arg9[%c0_22, %c0_23] : memref<256x128xf32, #tpu.memory_space<vmem>>, vector<256x128xf32>
      tpu.vector_store %arg9[%c0_22, %c0_23], %33 {strides = array<i32>} : memref<256x128xf32, #tpu.memory_space<vmem>>, vector<256x128xf32>,
    } else {
    }
    %c1_i32_7 = arith.constant 1 : i32
    %14 = arith.cmpi eq, %arg0, %c1_i32_7 : i32
    %15 = arith.extui %14 : i1 to i32
    %c0_i32_8 = arith.constant 0 : i32
    %16 = arith.cmpi ne, %15, %c0_i32_8 : i32
    scf.if %16 {
      %c256_i32 = arith.constant 256 : i32
      %27 = arith.muli %arg1, %c256_i32 : i32
      %28 = tpu.assume_multiple %27, 256 : i32
      %29 = arith.index_cast %28 : i32 to index
      %c0_15 = arith.constant 0 : index
      %30 = vector.load %arg9[%29, %c0_15] : memref<256x128xf32, #tpu.memory_space<vmem>>, vector<256x128xf32>
      %31 = arith.truncf %30 : vector<256x128xf32> to vector<256x128xbf16>
      %c0_16 = arith.constant 0 : index
      %c0_17 = arith.constant 0 : index
      %32 = vector.load %arg6[%c0_16, %c0_17] : memref<128x128xbf16, #tpu.memory_space<vmem>>, vector<128x128xbf16>
      %cst = arith.constant dense<0.000000e+00> : vector<256x128xf32>
      %33 = tpu.matmul %31, %32, %cst {dimension_numbers = #tpu.dot_dimension_numbers<[1], [0], [0], [1], [0, 0, 1, 1], [], []>} : vector<256x128xbf16>, vector<128x128xbf16>, vector<256x128xf32> -> vector<256x128xf32>
      %c0_18 = arith.constant 0 : index
      %c0_19 = arith.constant 0 : index
      %34 = vector.load %arg8[%c0_18, %c0_19] : memref<256x128xf32, #tpu.memory_space<vmem>>, vector<256x128xf32>
      %35 = arith.truncf %33 : vector<256x128xf32> to vector<256x128xbf16>
      %cst_20 = arith.constant dense<0.000000e+00> : vector<256x128xf32>
      %36 = tpu.matmul %10, %35, %cst_20 {dimension_numbers = #tpu.dot_dimension_numbers<[1], [0], [0], [1], [0, 0, 1, 1], [], []>} : vector<256x256xbf16>, vector<256x128xbf16>, vector<256x128xf32> -> vector<256x128xf32>
      %37 = arith.addf %34, %36 : vector<256x128xf32>
      %c0_21 = arith.constant 0 : index
      %c0_22 = arith.constant 0 : index
      %38 = vector.load %arg8[%c0_21, %c0_22] : memref<256x128xf32, #tpu.memory_space<vmem>>, vector<256x128xf32>
      tpu.vector_store %arg8[%c0_21, %c0_22], %37 {strides = array<i32>} : memref<256x128xf32, #tpu.memory_space<vmem>>, vector<256x128xf32>,
    } else {
    }
    %c0_i32_9 = arith.constant 0 : i32
    %17 = arith.cmpi eq, %arg0, %c0_i32_9 : i32
    %c0_i32_10 = arith.constant 0 : i32
    %18 = arith.cmpi eq, %arg1, %c0_i32_10 : i32
    %19 = arith.andi %17, %18 : i1
    %20 = arith.extui %19 : i1 to i32
    %c0_i32_11 = arith.constant 0 : i32
    %21 = arith.cmpi ne, %20, %c0_i32_11 : i32
    scf.if %21 {
      %c0_15 = arith.constant 0 : index
      %c0_16 = arith.constant 0 : index
      %27 = vector.load %arg9[%c0_15, %c0_16] : memref<256x128xf32, #tpu.memory_space<vmem>>, vector<256x128xf32>
      %c0_17 = arith.constant 0 : index
      %c0_18 = arith.constant 0 : index
      %28 = vector.load %arg5[%c0_17, %c0_18] : memref<1x128xf32, #tpu.memory_space<vmem>>, vector<1x128xf32>
      %29 = vector.broadcast %28 : vector<1x128xf32> to vector<256x128xf32>
      %30 = arith.addf %27, %29 : vector<256x128xf32>
      %cst = arith.constant 0.000000e+00 : f32
      %31 = vector.broadcast %cst : f32 to vector<256x128xf32>
      %32 = arith.maximumf %30, %31 : vector<256x128xf32>
      %c0_19 = arith.constant 0 : index
      %c0_20 = arith.constant 0 : index
      %33 = vector.load %arg9[%c0_19, %c0_20] : memref<256x128xf32, #tpu.memory_space<vmem>>, vector<256x128xf32>
      tpu.vector_store %arg9[%c0_19, %c0_20], %32 {strides = array<i32>} : memref<256x128xf32, #tpu.memory_space<vmem>>, vector<256x128xf32>,
    } else {
    }
    %c1_i32_12 = arith.constant 1 : i32
    %22 = arith.cmpi eq, %arg0, %c1_i32_12 : i32
    %c0_i32_13 = arith.constant 0 : i32
    %23 = arith.cmpi eq, %arg1, %c0_i32_13 : i32
    %24 = arith.andi %22, %23 : i1
    %25 = arith.extui %24 : i1 to i32
    %c0_i32_14 = arith.constant 0 : i32
    %26 = arith.cmpi ne, %25, %c0_i32_14 : i32
    scf.if %26 {
      %c0_15 = arith.constant 0 : index
      %c0_16 = arith.constant 0 : index
      %27 = vector.load %arg8[%c0_15, %c0_16] : memref<256x128xf32, #tpu.memory_space<vmem>>, vector<256x128xf32>
      %c0_17 = arith.constant 0 : index
      %c0_18 = arith.constant 0 : index
      %28 = vector.load %arg7[%c0_17, %c0_18] : memref<1x128xf32, #tpu.memory_space<vmem>>, vector<1x128xf32>
      %29 = vector.broadcast %28 : vector<1x128xf32> to vector<256x128xf32>
      %30 = arith.addf %27, %29 : vector<256x128xf32>
      %31 = tpu.iota {dimensions = array<i32: 1>} : vector<256x128xi32>
      %c8_i32 = arith.constant 8 : i32
      %32 = vector.broadcast %c8_i32 : i32 to vector<256x128xi32>
      %33 = arith.cmpi slt, %31, %32 : vector<256x128xi32>
      %cst = arith.constant -1.000000e+30 : f32
      %34 = vector.broadcast %cst : f32 to vector<256x128xf32>
      %35 = arith.select %33, %30, %34 : vector<256x128xi1>, vector<256x128xf32>
      %cst_19 = arith.constant dense<0xFF800000> : vector<256xf32>
      %36 = vector.multi_reduction <maximumf>, %35, %cst_19 [1] : vector<256x128xf32> to vector<256xf32>
      %37 = vector.shape_cast %36 : vector<256xf32> to vector<256x1xf32>
      %38 = vector.broadcast %37 : vector<256x1xf32> to vector<256x128xf32>
      %39 = arith.subf %35, %38 : vector<256x128xf32>
      %40 = math.exp %39 : vector<256x128xf32>
      %cst_20 = arith.constant dense<0.000000e+00> : vector<256xf32>
      %41 = vector.multi_reduction <add>, %40, %cst_20 [1] : vector<256x128xf32> to vector<256xf32>
      %42 = vector.shape_cast %41 : vector<256xf32> to vector<256x1xf32>
      %43 = math.log %42 : vector<256x1xf32>
      %44 = vector.broadcast %43 : vector<256x1xf32> to vector<256x128xf32>
      %45 = arith.subf %39, %44 : vector<256x128xf32>
      %c0_21 = arith.constant 0 : index
      %c0_22 = arith.constant 0 : index
      %46 = vector.load %arg8[%c0_21, %c0_22] : memref<256x128xf32, #tpu.memory_space<vmem>>, vector<256x128xf32>
      tpu.vector_store %arg8[%c0_21, %c0_22], %45 {strides = array<i32>} : memref<256x128xf32, #tpu.memory_space<vmem>>, vector<256x128xf32>,
    } else {
    }
    return
  }
  func.func @transform_0(%arg0: i32, %arg1: i32) -> (i32, i32) {
    %c1_i32 = arith.constant 1 : i32
    %0 = arith.subi %c1_i32, %arg0 : i32
    %1 = arith.muli %arg1, %0 : i32
    %c0_i32 = arith.constant 0 : i32
    %c0_i32_0 = arith.constant 0 : i32
    return %1, %c0_i32 : i32, i32
  }
  func.func @transform_1(%arg0: i32, %arg1: i32) -> (i32, i32) {
    %c0_i32 = arith.constant 0 : i32
    %c0_i32_0 = arith.constant 0 : i32
    return %c0_i32, %arg1 : i32, i32
  }
  func.func @transform_2(%arg0: i32, %arg1: i32) -> (i32, i32) {
    %c0_i32 = arith.constant 0 : i32
    %c0_i32_0 = arith.constant 0 : i32
    %c0_i32_1 = arith.constant 0 : i32
    return %c0_i32, %c0_i32_0 : i32, i32
  }
  func.func @transform_3(%arg0: i32, %arg1: i32) -> (i32, i32) {
    %c0_i32 = arith.constant 0 : i32
    %c0_i32_0 = arith.constant 0 : i32
    %c0_i32_1 = arith.constant 0 : i32
    return %c0_i32, %c0_i32_0 : i32, i32
  }
  func.func @transform_4(%arg0: i32, %arg1: i32) -> (i32, i32) {
    %c0_i32 = arith.constant 0 : i32
    %c0_i32_0 = arith.constant 0 : i32
    %c0_i32_1 = arith.constant 0 : i32
    return %c0_i32, %c0_i32_0 : i32, i32
  }
  func.func @transform_5(%arg0: i32, %arg1: i32) -> (i32, i32) {
    %c0_i32 = arith.constant 0 : i32
    %c0_i32_0 = arith.constant 0 : i32
    %c0_i32_1 = arith.constant 0 : i32
    return %c0_i32, %c0_i32_0 : i32, i32
  }
  func.func @transform_6(%arg0: i32, %arg1: i32) -> (i32, i32) {
    %c0_i32 = arith.constant 0 : i32
    %c0_i32_0 = arith.constant 0 : i32
    %c0_i32_1 = arith.constant 0 : i32
    return %c0_i32, %c0_i32_0 : i32, i32
  }
}

</mosaic_0001>

<llo_original>
// kernel: tpu_custom_call.1
$region0: #{tpu_custom_call.1}
  #allocation0 [shape = 'u32[]', space=smem, size = 0x4, offset = 0x4, fixed_abs, tag = 'smem constant byte address 0x4 - core index']
  #allocation1 [shape = 'u32[144,128]{1,0:T(1,128)}', space=vmem, size = 0x12000, scoped, tag = 'internal scratch']
  #allocation2 [shape = 'f32[256,128]{1,0:T(8,128)}', space=vmem, size = 0x20000, scoped, tag = 'scratch operand']
  %s0 = inlined_call_operand.hbm [shape: bf16[256,128], index: 0, kind: input, shape index: {}]
  %s1 = inlined_call_operand.hbm [shape: bf16[256,256], index: 1, kind: input, shape index: {}]
  %s2 = inlined_call_operand.hbm [shape: bf16[128,128], index: 2, kind: input, shape index: {}]
  %s3 = inlined_call_operand.vmem [shape: f32[1,128], index: 3, kind: input, shape index: {}]
  %s4 = inlined_call_operand.hbm [shape: bf16[128,128], index: 4, kind: input, shape index: {}]
  %s5 = inlined_call_operand.vmem [shape: f32[1,128], index: 5, kind: input, shape index: {}]
  %s6 = inlined_call_operand.hbm [shape: f32[256,128], index: 6, kind: output, shape index: {}]
  %s7 = sld [smem:[#allocation0]]
  $region97: #{tpu_custom_call.1} parent=0
    _
  %s9 = ssub.s32 1, %s7
  %s10 = scalar_select 0, %s9, %s7
  $region1: #{tpu_custom_call.1} parent=0
    #allocation3 [shape = 'u8[131072]{0}', space=vmem, size = 0x20000, scoped, tag = 'input window, operand 0']
    #allocation4 [shape = 's32[2]{0}', space=sflag, size = 0x8, scoped, tag = 'scoped memory for tpu_custom_call.1']
    #allocation5 [shape = 's32[2]{0}', space=sflag, size = 0x8, scoped, tag = 'scoped memory for tpu_custom_call.1']
    #allocation6 [shape = 'u8[131072]{0}', space=vmem, size = 0x20000, scoped, tag = 'input window, operand 1, single buffered']
    #allocation7 [shape = 's32[1]{0}', space=sflag, size = 0x4, scoped, tag = 'scoped memory for tpu_custom_call.1']
    #allocation8 [shape = 'u8[32768]{0}', space=vmem, size = 0x8000, scoped, tag = 'input window, operand 2, single buffered']
    #allocation9 [shape = 'u8[32768]{0}', space=vmem, size = 0x8000, scoped, tag = 'input window, operand 4, single buffered']
    #allocation10 [shape = 's32[1]{0}', space=sflag, size = 0x4, scoped, tag = 'scoped memory for tpu_custom_call.1']
    #allocation11 [shape = 'u8[131072]{0}', space=vmem, size = 0x20000, scoped, tag = 'output window, operand 0, single buffered']
    %11 = vsyncpa [#allocation4], 0
    %s12 = scalar_lea.sflag [#allocation4], 1
    %13 = vsyncpa %s12, 0
    %14 = vsyncpa [#allocation7], 0
    %15 = vsyncpa [#allocation10], 0
    %16 = vsyncpa [#allocation5], 0
    loop: start=0, step=1, limit=4
    $region2: #{tpu_custom_call.1} parent=1 // loop_pre_header
      _
    $region3: #{tpu_custom_call.1} parent=1 // loop_header
      %s18 = sphi 0, %s22
      %p19 = scmp.ge.s32.totalorder %s18, 4
      %s25 = sphi 0, %s37
      %s26 = sphi 0, %s33
      %s27 = sphi 0, %s25
      %s28 = sphi 0, %s26
      %s29 = sphi 0, %s27
      %s30 = sphi 0, %s28
      %s44 = sphi 0, %s46
      %s47 = sphi 0, %s44
      %s48 = sphi 0, %s47
      %s64 = sphi 0, %s48
      %s70 = sphi 0, %s72
      %s73 = sphi 0, %s70
      %s74 = sphi 0, %s73
      %s90 = sphi 0, %s74
      %s94 = sphi 0, %s94
      %s96 = sphi 0, %s94
      %s97 = sphi 0, %s96
      %s111 = sphi 0, %s97
      %s115 = sphi 0, %s115
      %s117 = sphi 0, %s115
      %s118 = sphi 0, %s117
      %s132 = sphi 0, %s118
      %s136 = sphi 0, %s136
      %s138 = sphi 0, %s136
      %s139 = sphi 0, %s138
      %s153 = sphi 0, %s139
      %s157 = sphi 0, %s157
      %s159 = sphi 0, %s157
      %s160 = sphi 0, %s159
      %s174 = sphi 0, %s160
      %s178 = sphi 0, %s178
      %s180 = sphi 0, %s178
      %s181 = sphi 0, %s180
      %s195 = sphi 0, %s181
    $region4: #{tpu_custom_call.1} parent=1 // loop_header_branch
      %21 = sbr.rel (%p19) target = $region8
    $region5: #{tpu_custom_call.1} parent=1 // loop_body
      %s23 = ssub.s32 %s18, 1
      %s24 = ssub.s32 %s18, 2
      %s31 = sadd.s32 1, %s26
      %p32 = scmp.ge.s32.totalorder %s31, 1
      %s33 = scalar_select %p32, 0, %s31
      %s34 = sadd.s32 1, %s25
      %s35 = scalar_select %p32, %s34, %s25
      %p36 = scmp.ge.s32.totalorder %s35, 2
      %s37 = scalar_select %p36, 0, %s35
      %s38 = ssub.s32 1, %s25
      %s39 = smul.u32 %s26, %s38
      %s40 = ssub.s32 1, %s37
      %s41 = smul.u32 %s33, %s40
      %s42 = ssub.s32 %s39, %s41
      %p43 = scmp.eq.s32.totalorder %s42, 0
      %s45 = sadd.s32 %s44, 1
      %s46 = scalar_select %p43, %s44, %s45
      %p49 = pneg %p43
      %p50 = scmp.eq.s32.totalorder %s18, 1
      %p51 = por %p49, %p50
      %p52 = scmp.ne.s32.totalorder %s44, %s47
      %p53 = scmp.eq.s32.totalorder %s18, 0
      %p54 = por %p52, %p53
      %p55 = scmp.ne.s32.totalorder %s44, %s47
      %p56 = scmp.eq.s32.totalorder %s23, 1
      %p57 = por %p55, %p56
      %p58 = scmp.ne.s32.totalorder %s47, %s48
      %p59 = scmp.eq.s32.totalorder %s23, 0
      %p60 = por %p58, %p59
      %p61 = scmp.ne.s32.totalorder %s47, %s48
      %p62 = scmp.eq.s32.totalorder %s24, 1
      %p63 = por %p61, %p62
      %p65 = scmp.ne.s32.totalorder %s48, %s64
      %p66 = scmp.eq.s32.totalorder %s24, 0
      %p67 = por %p65, %p66
      %s68 = ssub.s32 %s26, %s33
      %p69 = scmp.eq.s32.totalorder %s68, 0
      %s71 = sadd.s32 %s70, 1
      %s72 = scalar_select %p69, %s70, %s71
      %p75 = pneg %p69
      %p76 = scmp.eq.s32.totalorder %s18, 1
      %p77 = por %p75, %p76
      %p78 = scmp.ne.s32.totalorder %s70, %s73
      %p79 = scmp.eq.s32.totalorder %s18, 0
      %p80 = por %p78, %p79
      %p81 = scmp.ne.s32.totalorder %s70, %s73
      %p82 = scmp.eq.s32.totalorder %s23, 1
      %p83 = por %p81, %p82
      %p84 = scmp.ne.s32.totalorder %s73, %s74
      %p85 = scmp.eq.s32.totalorder %s23, 0
      %p86 = por %p84, %p85
      %p87 = scmp.ne.s32.totalorder %s73, %s74
      %p88 = scmp.eq.s32.totalorder %s24, 1
      %p89 = por %p87, %p88
      %p91 = scmp.ne.s32.totalorder %s74, %s90
      %p92 = scmp.eq.s32.totalorder %s24, 0
      %p93 = por %p91, %p92
      %s95 = sadd.s32 %s94, 1
      %p98 = scmp.eq.s32.totalorder %s18, 1
      %p99 = scmp.ne.s32.totalorder %s94, %s96
      %p100 = scmp.eq.s32.totalorder %s18, 0
      %p101 = por %p99, %p100
      %p102 = scmp.ne.s32.totalorder %s94, %s96
      %p103 = scmp.eq.s32.totalorder %s23, 1
      %p104 = por %p102, %p103
      %p105 = scmp.ne.s32.totalorder %s96, %s97
      %p106 = scmp.eq.s32.totalorder %s23, 0
      %p107 = por %p105, %p106
      %p108 = scmp.ne.s32.totalorder %s96, %s97
      %p109 = scmp.eq.s32.totalorder %s24, 1
      %p110 = por %p108, %p109
      %p112 = scmp.ne.s32.totalorder %s97, %s111
      %p113 = scmp.eq.s32.totalorder %s24, 0
      %p114 = por %p112, %p113
      %s116 = sadd.s32 %s115, 1
      %p119 = scmp.eq.s32.totalorder %s18, 1
      %p120 = scmp.ne.s32.totalorder %s115, %s117
      %p121 = scmp.eq.s32.totalorder %s18, 0
      %p122 = por %p120, %p121
      %p123 = scmp.ne.s32.totalorder %s115, %s117
      %p124 = scmp.eq.s32.totalorder %s23, 1
      %p125 = por %p123, %p124
      %p126 = scmp.ne.s32.totalorder %s117, %s118
      %p127 = scmp.eq.s32.totalorder %s23, 0
      %p128 = por %p126, %p127
      %p129 = scmp.ne.s32.totalorder %s117, %s118
      %p130 = scmp.eq.s32.totalorder %s24, 1
      %p131 = por %p129, %p130
      %p133 = scmp.ne.s32.totalorder %s118, %s132
      %p134 = scmp.eq.s32.totalorder %s24, 0
      %p135 = por %p133, %p134
      %s137 = sadd.s32 %s136, 1
      %p140 = scmp.eq.s32.totalorder %s18, 1
      %p141 = scmp.ne.s32.totalorder %s136, %s138
      %p142 = scmp.eq.s32.totalorder %s18, 0
      %p143 = por %p141, %p142
      %p144 = scmp.ne.s32.totalorder %s136, %s138
      %p145 = scmp.eq.s32.totalorder %s23, 1
      %p146 = por %p144, %p145
      %p147 = scmp.ne.s32.totalorder %s138, %s139
      %p148 = scmp.eq.s32.totalorder %s23, 0
      %p149 = por %p147, %p148
      %p150 = scmp.ne.s32.totalorder %s138, %s139
      %p151 = scmp.eq.s32.totalorder %s24, 1
      %p152 = por %p150, %p151
      %p154 = scmp.ne.s32.totalorder %s139, %s153
      %p155 = scmp.eq.s32.totalorder %s24, 0
      %p156 = por %p154, %p155
      %s158 = sadd.s32 %s157, 1
      %p161 = scmp.eq.s32.totalorder %s18, 1
      %p162 = scmp.ne.s32.totalorder %s157, %s159
      %p163 = scmp.eq.s32.totalorder %s18, 0
      %p164 = por %p162, %p163
      %p165 = scmp.ne.s32.totalorder %s157, %s159
      %p166 = scmp.eq.s32.totalorder %s23, 1
      %p167 = por %p165, %p166
      %p168 = scmp.ne.s32.totalorder %s159, %s160
      %p169 = scmp.eq.s32.totalorder %s23, 0
      %p170 = por %p168, %p169
      %p171 = scmp.ne.s32.totalorder %s159, %s160
      %p172 = scmp.eq.s32.totalorder %s24, 1
      %p173 = por %p171, %p172
      %p175 = scmp.ne.s32.totalorder %s160, %s174
      %p176 = scmp.eq.s32.totalorder %s24, 0
      %p177 = por %p175, %p176
      %s179 = sadd.s32 %s178, 1
      %p182 = scmp.eq.s32.totalorder %s18, 1
      %p183 = scmp.ne.s32.totalorder %s178, %s180
      %p184 = scmp.eq.s32.totalorder %s18, 0
      %p185 = por %p183, %p184
      %p186 = scmp.ne.s32.totalorder %s178, %s180
      %p187 = scmp.eq.s32.totalorder %s23, 1
      %p188 = por %p186, %p187
      %p189 = scmp.ne.s32.totalorder %s180, %s181
      %p190 = scmp.eq.s32.totalorder %s23, 0
      %p191 = por %p189, %p190
      %p192 = scmp.ne.s32.totalorder %s180, %s181
      %p193 = scmp.eq.s32.totalorder %s24, 1
      %p194 = por %p192, %p193
      %p196 = scmp.ne.s32.totalorder %s181, %s195
      %p197 = scmp.eq.s32.totalorder %s24, 0
      %p198 = por %p196, %p197
      %p199 = scmp.le.s32.totalorder 1, %s18
      %p200 = scmp.lt.s32.totalorder %s18, 3
      %p201 = pnand %p199, %p200
      %p202 = pneg %p201
      // Predicated region
      $region9: #{tpu_custom_call.1} parent=5 // pred_check
        _
      $region10: #{tpu_custom_call.1} parent=5 // pred_check_branch
        %204 = sbr.rel (%p201) target = $region12
      $region11: #{tpu_custom_call.1} parent=5 // pred_region
        %s205 = ssub.s32 %s18, 1
        // Predicated region
        $region13: #{tpu_custom_call.1} parent=11 // pred_check
          %p206 = pneg %p86
        $region14: #{tpu_custom_call.1} parent=11 // pred_check_branch
          %208 = sbr.rel (%p206) target = $region16
        $region15: #{tpu_custom_call.1} parent=11 // pred_region
          %s209 = smul.u32 2, %s28
          %s211 = ssub.s32 4096, 4096
          %212 = vsyncadd [#allocation7], %s211
          %s213 = smul.addr %s209, 64
          %s214 = scalar_lea.hbm %s1, %s213
          %s215 = sshll.u32 [#allocation6], 4
          %s216 = int_to_ptr.vmem [resolvable:$true] %s215
          %221 = dma.hbm_to_vmem [thread:$0]  %s214, 4096, %s216, [#allocation7], 128, 128, 8
        $region16: #{tpu_custom_call.1} parent=11 // pred_fallthru
          _
        // Predicated region
        $region17: #{tpu_custom_call.1} parent=11 // pred_check
          %p222 = pneg %p107
        $region18: #{tpu_custom_call.1} parent=11 // pred_check_branch
          %224 = sbr.rel (%p222) target = $region20
        $region19: #{tpu_custom_call.1} parent=11 // pred_region
          %s226 = ssub.s32 1024, 1024
          %227 = vsyncadd [#allocation7], %s226
          %s228 = sshll.u32 [#allocation8], 4
          %s229 = int_to_ptr.vmem [resolvable:$true] %s228
          %234 = dma.hbm_to_vmem [thread:$0]  %s2, 1024, %s229, [#allocation7], 64, 64, 4
        $region20: #{tpu_custom_call.1} parent=11 // pred_fallthru
          _
        // Predicated region
        $region21: #{tpu_custom_call.1} parent=11 // pred_check
          %p235 = pneg %p128
        $region22: #{tpu_custom_call.1} parent=11 // pred_check_branch
          %237 = sbr.rel (%p235) target = $region24
        $region23: #{tpu_custom_call.1} parent=11 // pred_region
          _
        $region24: #{tpu_custom_call.1} parent=11 // pred_fallthru
          _
        // Predicated region
        $region25: #{tpu_custom_call.1} parent=11 // pred_check
          %p238 = pneg %p149
        $region26: #{tpu_custom_call.1} parent=11 // pred_check_branch
          %240 = sbr.rel (%p238) target = $region28
        $region27: #{tpu_custom_call.1} parent=11 // pred_region
          %s242 = ssub.s32 1024, 1024
          %243 = vsyncadd [#allocation10], %s242
          %s244 = sshll.u32 [#allocation9], 4
          %s245 = int_to_ptr.vmem [resolvable:$true] %s244
          %250 = dma.hbm_to_vmem [thread:$0]  %s4, 1024, %s245, [#allocation10], 64, 64, 4
        $region28: #{tpu_custom_call.1} parent=11 // pred_fallthru
          _
        // Predicated region
        $region29: #{tpu_custom_call.1} parent=11 // pred_check
          %p251 = pneg %p170
        $region30: #{tpu_custom_call.1} parent=11 // pred_check_branch
          %253 = sbr.rel (%p251) target = $region32
        $region31: #{tpu_custom_call.1} parent=11 // pred_region
          _
        $region32: #{tpu_custom_call.1} parent=11 // pred_fallthru
          _
      $region12: #{tpu_custom_call.1} parent=5 // pred_fallthru
        _
      %p254 = scmp.lt.s32.totalorder %s18, 2
      // Predicated region
      $region33: #{tpu_custom_call.1} parent=5 // pred_check
        %p255 = pneg %p254
      $region34: #{tpu_custom_call.1} parent=5 // pred_check_branch
        %257 = sbr.rel (%p255) target = $region36
      $region35: #{tpu_custom_call.1} parent=5 // pred_region
        // Predicated region
        $region37: #{tpu_custom_call.1} parent=35 // pred_check
          %p258 = pneg %p54
        $region38: #{tpu_custom_call.1} parent=35 // pred_check_branch
          %260 = sbr.rel (%p258) target = $region40
        $region39: #{tpu_custom_call.1} parent=35 // pred_region
          %s261 = sand.u32 %s44, 1
          %s262 = scalar_lea.sflag [#allocation4], %s261
          %s263 = sand.u32 %s44, 1
          %s264 = smul.addr %s263, 128
          %s265 = scalar_lea.vmem [#allocation3], %s264
          %s266 = ssub.s32 1, %s25
          %s267 = smul.u32 %s26, %s266
          %s268 = smul.u32 32, %s267
          %s270 = ssub.s32 2048, 2048
          %271 = vsyncadd %s262, %s270
          %s272 = smul.addr %s268, 64
          %s273 = scalar_lea.hbm %s0, %s272
          %s274 = sshll.u32 %s265, 4
          %s275 = int_to_ptr.vmem [resolvable:$true] %s274
          %280 = dma.hbm_to_vmem [thread:$0]  %s273, 2048, %s275, %s262, 64, 64, 4
        $region40: #{tpu_custom_call.1} parent=35 // pred_fallthru
          _
      $region36: #{tpu_custom_call.1} parent=5 // pred_fallthru
        _
      %p281 = scmp.le.s32.totalorder 1, %s18
      %p282 = scmp.lt.s32.totalorder %s18, 3
      %p283 = pnand %p281, %p282
      %p284 = pneg %p283
      // Predicated region
      $region41: #{tpu_custom_call.1} parent=5 // pred_check
        _
      $region42: #{tpu_custom_call.1} parent=5 // pred_check_branch
        %286 = sbr.rel (%p283) target = $region44
      $region43: #{tpu_custom_call.1} parent=5 // pred_region
        %s287 = ssub.s32 %s18, 1
        %s288 = sand.u32 %s47, 1
        %s289 = scalar_lea.sflag [#allocation4], %s288
        %s290 = sand.u32 %s47, 1
        %s291 = smul.addr %s290, 128
        %s292 = scalar_lea.vmem [#allocation3], %s291
        // Predicated region
        $region45: #{tpu_custom_call.1} parent=43 // pred_check
          %p293 = pneg %p60
        $region46: #{tpu_custom_call.1} parent=43 // pred_check_branch
          %295 = sbr.rel (%p293) target = $region48
        $region47: #{tpu_custom_call.1} parent=43 // pred_region
          %296 = dma.done %s289, 2048
        $region48: #{tpu_custom_call.1} parent=43 // pred_fallthru
          _
        // Predicated region
        $region49: #{tpu_custom_call.1} parent=43 // pred_check
          %p297 = pneg %p86
        $region50: #{tpu_custom_call.1} parent=43 // pred_check_branch
          %299 = sbr.rel (%p297) target = $region52
        $region51: #{tpu_custom_call.1} parent=43 // pred_region
          %300 = dma.done [#allocation7], 4096
        $region52: #{tpu_custom_call.1} parent=43 // pred_fallthru
          _
        // Predicated region
        $region53: #{tpu_custom_call.1} parent=43 // pred_check
          %p301 = pneg %p107
        $region54: #{tpu_custom_call.1} parent=43 // pred_check_branch
          %303 = sbr.rel (%p301) target = $region56
        $region55: #{tpu_custom_call.1} parent=43 // pred_region
          %304 = dma.done [#allocation7], 1024
        $region56: #{tpu_custom_call.1} parent=43 // pred_fallthru
          _
        // Predicated region
        $region57: #{tpu_custom_call.1} parent=43 // pred_check
          %p305 = pneg %p149
        $region58: #{tpu_custom_call.1} parent=43 // pred_check_branch
          %307 = sbr.rel (%p305) target = $region60
        $region59: #{tpu_custom_call.1} parent=43 // pred_region
          %308 = dma.done [#allocation10], 1024
        $region60: #{tpu_custom_call.1} parent=43 // pred_fallthru
          _
        %s309 = sand.u32 %s47, 1
        %s310 = scalar_lea.sflag [#allocation4], %s309
        %s311 = sand.u32 %s47, 1
        %s312 = smul.addr %s311, 128
        %s313 = scalar_lea.vmem [#allocation3], %s312
        %p314 = pneg %p60
        %p315 = pneg %p57
        %p316 = pneg %p86
        %p317 = pneg %p83
        %p318 = pneg %p107
        %p319 = pneg %p104
        %p320 = pneg %p128
        %p321 = pneg %p125
        %p322 = pneg %p149
        %p323 = pneg %p146
        %p324 = pneg %p170
        %p325 = pneg %p167
        %p326 = pneg %p191
        %p327 = pneg %p188
        %s328 = ssub.s32 1, %s27
        %s329 = smul.u32 %s28, %s328
        %s330 = smul.u32 32, %s329
        %s331 = smul.u32 2, %s28
        %p333 = scmp.eq.s32.totalorder %s27, 0
        %p334 = scmp.eq.s32.totalorder %s28, 0
        %p335 = pnand %p333, %p334
        %p336 = pneg %p335
        // Predicated region
        $region61: #{tpu_custom_call.1} parent=43 // pred_check
          _
        $region62: #{tpu_custom_call.1} parent=43 // pred_check_branch
          %338 = sbr.rel (%p335) target = $region64
        $region63: #{tpu_custom_call.1} parent=43 // pred_region
          %339 = vst [vmem:[#allocation2] sm:$0xff] 0.0
          %340 = vst [vmem:[#allocation2 + $0x8] sm:$0xff] 0.0
          %341 = vst [vmem:[#allocation2 + $0x10] sm:$0xff] 0.0
          %342 = vst [vmem:[#allocation2 + $0x18] sm:$0xff] 0.0
          %343 = vst [vmem:[#allocation2 + $0x20] sm:$0xff] 0.0
          %344 = vst [vmem:[#allocation2 + $0x28] sm:$0xff] 0.0
          %345 = vst [vmem:[#allocation2 + $0x30] sm:$0xff] 0.0
          %346 = vst [vmem:[#allocation2 + $0x38] sm:$0xff] 0.0
          %347 = vst [vmem:[#allocation2 + $0x40] sm:$0xff] 0.0
          %348 = vst [vmem:[#allocation2 + $0x48] sm:$0xff] 0.0
          %349 = vst [vmem:[#allocation2 + $0x50] sm:$0xff] 0.0
          %350 = vst [vmem:[#allocation2 + $0x58] sm:$0xff] 0.0
          %351 = vst [vmem:[#allocation2 + $0x60] sm:$0xff] 0.0
          %352 = vst [vmem:[#allocation2 + $0x68] sm:$0xff] 0.0
          %353 = vst [vmem:[#allocation2 + $0x70] sm:$0xff] 0.0
          %354 = vst [vmem:[#allocation2 + $0x78] sm:$0xff] 0.0
          %355 = vst [vmem:[#allocation2 + $0x80] sm:$0xff] 0.0
          %356 = vst [vmem:[#allocation2 + $0x88] sm:$0xff] 0.0
          %357 = vst [vmem:[#allocation2 + $0x90] sm:$0xff] 0.0
          %358 = vst [vmem:[#allocation2 + $0x98] sm:$0xff] 0.0
          %359 = vst [vmem:[#allocation2 + $0xa0] sm:$0xff] 0.0
          %360 = vst [vmem:[#allocation2 + $0xa8] sm:$0xff] 0.0
          %361 = vst [vmem:[#allocation2 + $0xb0] sm:$0xff] 0.0
          %362 = vst [vmem:[#allocation2 + $0xb8] sm:$0xff] 0.0
          %363 = vst [vmem:[#allocation2 + $0xc0] sm:$0xff] 0.0
          %364 = vst [vmem:[#allocation2 + $0xc8] sm:$0xff] 0.0
          %365 = vst [vmem:[#allocation2 + $0xd0] sm:$0xff] 0.0
          %366 = vst [vmem:[#allocation2 + $0xd8] sm:$0xff] 0.0
          %367 = vst [vmem:[#allocation2 + $0xe0] sm:$0xff] 0.0
          %368 = vst [vmem:[#allocation2 + $0xe8] sm:$0xff] 0.0
          %369 = vst [vmem:[#allocation2 + $0xf0] sm:$0xff] 0.0
          %370 = vst [vmem:[#allocation2 + $0xf8] sm:$0xff] 0.0
        $region64: #{tpu_custom_call.1} parent=43 // pred_fallthru
          _
        %p371 = scmp.eq.s32.totalorder %s27, 1
        %p372 = pnand %p371, %p334
        %p373 = pneg %p372
        // Predicated region
        $region65: #{tpu_custom_call.1} parent=43 // pred_check
          _
        $region66: #{tpu_custom_call.1} parent=43 // pred_check_branch
          %375 = sbr.rel (%p372) target = $region68
        $region67: #{tpu_custom_call.1} parent=43 // pred_region
          %376 = vst [vmem:[#allocation11] sm:$0xff] 0.0
          %377 = vst [vmem:[#allocation11 + $0x8] sm:$0xff] 0.0
          %378 = vst [vmem:[#allocation11 + $0x10] sm:$0xff] 0.0
          %379 = vst [vmem:[#allocation11 + $0x18] sm:$0xff] 0.0
          %380 = vst [vmem:[#allocation11 + $0x20] sm:$0xff] 0.0
          %381 = vst [vmem:[#allocation11 + $0x28] sm:$0xff] 0.0
          %382 = vst [vmem:[#allocation11 + $0x30] sm:$0xff] 0.0
          %383 = vst [vmem:[#allocation11 + $0x38] sm:$0xff] 0.0
          %384 = vst [vmem:[#allocation11 + $0x40] sm:$0xff] 0.0
          %385 = vst [vmem:[#allocation11 + $0x48] sm:$0xff] 0.0
          %386 = vst [vmem:[#allocation11 + $0x50] sm:$0xff] 0.0
          %387 = vst [vmem:[#allocation11 + $0x58] sm:$0xff] 0.0
          %388 = vst [vmem:[#allocation11 + $0x60] sm:$0xff] 0.0
          %389 = vst [vmem:[#allocation11 + $0x68] sm:$0xff] 0.0
          %390 = vst [vmem:[#allocation11 + $0x70] sm:$0xff] 0.0
          %391 = vst [vmem:[#allocation11 + $0x78] sm:$0xff] 0.0
          %392 = vst [vmem:[#allocation11 + $0x80] sm:$0xff] 0.0
          %393 = vst [vmem:[#allocation11 + $0x88] sm:$0xff] 0.0
          %394 = vst [vmem:[#allocation11 + $0x90] sm:$0xff] 0.0
          %395 = vst [vmem:[#allocation11 + $0x98] sm:$0xff] 0.0
          %396 = vst [vmem:[#allocation11 + $0xa0] sm:$0xff] 0.0
          %397 = vst [vmem:[#allocation11 + $0xa8] sm:$0xff] 0.0
          %398 = vst [vmem:[#allocation11 + $0xb0] sm:$0xff] 0.0
          %399 = vst [vmem:[#allocation11 + $0xb8] sm:$0xff] 0.0
          %400 = vst [vmem:[#allocation11 + $0xc0] sm:$0xff] 0.0
          %401 = vst [vmem:[#allocation11 + $0xc8] sm:$0xff] 0.0
          %402 = vst [vmem:[#allocation11 + $0xd0] sm:$0xff] 0.0
          %403 = vst [vmem:[#allocation11 + $0xd8] sm:$0xff] 0.0
          %404 = vst [vmem:[#allocation11 + $0xe0] sm:$0xff] 0.0
          %405 = vst [vmem:[#allocation11 + $0xe8] sm:$0xff] 0.0
          %406 = vst [vmem:[#allocation11 + $0xf0] sm:$0xff] 0.0
          %407 = vst [vmem:[#allocation11 + $0xf8] sm:$0xff] 0.0
        $region68: #{tpu_custom_call.1} parent=43 // pred_fallthru
          _
        %v408 = vld [vmem:[#allocation6] sm:$0xff]
        %v409 = vld [vmem:[#allocation6 + $0x8] sm:$0xff]
        %v410 = vld [vmem:[#allocation6 + $0x10] sm:$0xff]
        %v411 = vld [vmem:[#allocation6 + $0x18] sm:$0xff]
        %v412 = vld [vmem:[#allocation6 + $0x20] sm:$0xff]
        %v413 = vld [vmem:[#allocation6 + $0x28] sm:$0xff]
        %v414 = vld [vmem:[#allocation6 + $0x30] sm:$0xff]
        %v415 = vld [vmem:[#allocation6 + $0x38] sm:$0xff]
        %v416 = vld [vmem:[#allocation6 + $0x40] sm:$0xff]
        %v417 = vld [vmem:[#allocation6 + $0x48] sm:$0xff]
        %v418 = vld [vmem:[#allocation6 + $0x50] sm:$0xff]
        %v419 = vld [vmem:[#allocation6 + $0x58] sm:$0xff]
        %v420 = vld [vmem:[#allocation6 + $0x60] sm:$0xff]
        %v421 = vld [vmem:[#allocation6 + $0x68] sm:$0xff]
        %v422 = vld [vmem:[#allocation6 + $0x70] sm:$0xff]
        %v423 = vld [vmem:[#allocation6 + $0x78] sm:$0xff]
        %v424 = vld [vmem:[#allocation6 + $0x80] sm:$0xff]
        %v425 = vld [vmem:[#allocation6 + $0x88] sm:$0xff]
        %v426 = vld [vmem:[#allocation6 + $0x90] sm:$0xff]
        %v427 = vld [vmem:[#allocation6 + $0x98] sm:$0xff]
        %v428 = vld [vmem:[#allocation6 + $0xa0] sm:$0xff]
        %v429 = vld [vmem:[#allocation6 + $0xa8] sm:$0xff]
        %v430 = vld [vmem:[#allocation6 + $0xb0] sm:$0xff]
        %v431 = vld [vmem:[#allocation6 + $0xb8] sm:$0xff]
        %v432 = vld [vmem:[#allocation6 + $0xc0] sm:$0xff]
        %v433 = vld [vmem:[#allocation6 + $0xc8] sm:$0xff]
        %v434 = vld [vmem:[#allocation6 + $0xd0] sm:$0xff]
        %v435 = vld [vmem:[#allocation6 + $0xd8] sm:$0xff]
        %v436 = vld [vmem:[#allocation6 + $0xe0] sm:$0xff]
        %v437 = vld [vmem:[#allocation6 + $0xe8] sm:$0xff]
        %v438 = vld [vmem:[#allocation6 + $0xf0] sm:$0xff]
        %v439 = vld [vmem:[#allocation6 + $0xf8] sm:$0xff]
        // Predicated region
        $region69: #{tpu_custom_call.1} parent=43 // pred_check
          %p440 = pneg %p333
        $region70: #{tpu_custom_call.1} parent=43 // pred_check_branch
          %442 = sbr.rel (%p440) target = $region72
        $region71: #{tpu_custom_call.1} parent=43 // pred_region
          %v443 = vld [vmem:[%s292] sm:$0xf]
          %v444 = vld [vmem:[%s292 + $0x4] sm:$0xf]
          %v445 = vld [vmem:[%s292 + $0x8] sm:$0xf]
          %v446 = vld [vmem:[%s292 + $0xc] sm:$0xf]
          %v447 = vld [vmem:[%s292 + $0x10] sm:$0xf]
          %v448 = vld [vmem:[%s292 + $0x14] sm:$0xf]
          %v449 = vld [vmem:[%s292 + $0x18] sm:$0xf]
          %v450 = vld [vmem:[%s292 + $0x1c] sm:$0xf]
          %v451 = vld [vmem:[%s292 + $0x20] sm:$0xf]
          %v452 = vld [vmem:[%s292 + $0x24] sm:$0xf]
          %v453 = vld [vmem:[%s292 + $0x28] sm:$0xf]
          %v454 = vld [vmem:[%s292 + $0x2c] sm:$0xf]
          %v455 = vld [vmem:[%s292 + $0x30] sm:$0xf]
          %v456 = vld [vmem:[%s292 + $0x34] sm:$0xf]
          %v457 = vld [vmem:[%s292 + $0x38] sm:$0xf]
          %v458 = vld [vmem:[%s292 + $0x3c] sm:$0xf]
          %v459 = vld [vmem:[%s292 + $0x40] sm:$0xf]
          %v460 = vld [vmem:[%s292 + $0x44] sm:$0xf]
          %v461 = vld [vmem:[%s292 + $0x48] sm:$0xf]
          %v462 = vld [vmem:[%s292 + $0x4c] sm:$0xf]
          %v463 = vld [vmem:[%s292 + $0x50] sm:$0xf]
          %v464 = vld [vmem:[%s292 + $0x54] sm:$0xf]
          %v465 = vld [vmem:[%s292 + $0x58] sm:$0xf]
          %v466 = vld [vmem:[%s292 + $0x5c] sm:$0xf]
          %v467 = vld [vmem:[%s292 + $0x60] sm:$0xf]
          %v468 = vld [vmem:[%s292 + $0x64] sm:$0xf]
          %v469 = vld [vmem:[%s292 + $0x68] sm:$0xf]
          %v470 = vld [vmem:[%s292 + $0x6c] sm:$0xf]
          %v471 = vld [vmem:[%s292 + $0x70] sm:$0xf]
          %v472 = vld [vmem:[%s292 + $0x74] sm:$0xf]
          %v473 = vld [vmem:[%s292 + $0x78] sm:$0xf]
          %v474 = vld [vmem:[%s292 + $0x7c] sm:$0xf]
          %v475 = vld [vmem:[#allocation8] sm:$0xf]
          %v476 = vld [vmem:[#allocation8 + $0x4] sm:$0xf]
          %v477 = vld [vmem:[#allocation8 + $0x8] sm:$0xf]
          %v478 = vld [vmem:[#allocation8 + $0xc] sm:$0xf]
          %v479 = vld [vmem:[#allocation8 + $0x10] sm:$0xf]
          %v480 = vld [vmem:[#allocation8 + $0x14] sm:$0xf]
          %v481 = vld [vmem:[#allocation8 + $0x18] sm:$0xf]
          %v482 = vld [vmem:[#allocation8 + $0x1c] sm:$0xf]
          %v483 = vld [vmem:[#allocation8 + $0x20] sm:$0xf]
          %v484 = vld [vmem:[#allocation8 + $0x24] sm:$0xf]
          %v485 = vld [vmem:[#allocation8 + $0x28] sm:$0xf]
          %v486 = vld [vmem:[#allocation8 + $0x2c] sm:$0xf]
          %v487 = vld [vmem:[#allocation8 + $0x30] sm:$0xf]
          %v488 = vld [vmem:[#allocation8 + $0x34] sm:$0xf]
          %v489 = vld [vmem:[#allocation8 + $0x38] sm:$0xf]
          %v490 = vld [vmem:[#allocation8 + $0x3c] sm:$0xf]
          %v523 = vunpack.c.l.b16 %v443
          %v524 = vunpack.c.l.b16 %v444
          %v525 = vunpack.c.l.b16 %v445
          %v526 = vunpack.c.l.b16 %v446
          %v527 = vunpack.c.l.b16 %v447
          %v528 = vunpack.c.l.b16 %v448
          %v529 = vunpack.c.l.b16 %v449
          %v530 = vunpack.c.l.b16 %v450
          %v531 = vunpack.c.l.b16 %v451
          %v532 = vunpack.c.l.b16 %v452
          %v533 = vunpack.c.l.b16 %v453
          %v534 = vunpack.c.l.b16 %v454
          %v535 = vunpack.c.l.b16 %v455
          %v536 = vunpack.c.l.b16 %v456
          %v537 = vunpack.c.l.b16 %v457
          %v538 = vunpack.c.l.b16 %v458
          %v539 = vunpack.c.l.b16 %v459
          %v540 = vunpack.c.l.b16 %v460
          %v541 = vunpack.c.l.b16 %v461
          %v542 = vunpack.c.l.b16 %v462
          %v543 = vunpack.c.l.b16 %v463
          %v544 = vunpack.c.l.b16 %v464
          %v545 = vunpack.c.l.b16 %v465
          %v546 = vunpack.c.l.b16 %v466
          %v547 = vunpack.c.l.b16 %v467
          %v548 = vunpack.c.l.b16 %v468
          %v549 = vunpack.c.l.b16 %v469
          %v550 = vunpack.c.l.b16 %v470
          %v551 = vunpack.c.l.b16 %v471
          %v552 = vunpack.c.l.b16 %v472
          %v553 = vunpack.c.l.b16 %v473
          %v554 = vunpack.c.l.b16 %v474
          %v555 = vpack.c.b16 %v524, %v523
          %v556 = vpack.c.b16 %v526, %v525
          %v557 = vpack.c.b16 %v528, %v527
          %v558 = vpack.c.b16 %v530, %v529
          %v559 = vpack.c.b16 %v532, %v531
          %v560 = vpack.c.b16 %v534, %v533
          %v561 = vpack.c.b16 %v536, %v535
          %v562 = vpack.c.b16 %v538, %v537
          %v563 = vpack.c.b16 %v540, %v539
          %v564 = vpack.c.b16 %v542, %v541
          %v565 = vpack.c.b16 %v544, %v543
          %v566 = vpack.c.b16 %v546, %v545
          %v567 = vpack.c.b16 %v548, %v547
          %v568 = vpack.c.b16 %v550, %v549
          %v569 = vpack.c.b16 %v552, %v551
          %v570 = vpack.c.b16 %v554, %v553
          %v603 = vunpack.c.l.b16 %v475
          %v604 = vunpack.c.l.b16 %v476
          %v605 = vunpack.c.l.b16 %v477
          %v606 = vunpack.c.l.b16 %v478
          %v607 = vunpack.c.l.b16 %v479
          %v608 = vunpack.c.l.b16 %v480
          %v609 = vunpack.c.l.b16 %v481
          %v610 = vunpack.c.l.b16 %v482
          %v611 = vunpack.c.l.b16 %v483
          %v612 = vunpack.c.l.b16 %v484
          %v613 = vunpack.c.l.b16 %v485
          %v614 = vunpack.c.l.b16 %v486
          %v615 = vunpack.c.l.b16 %v487
          %v616 = vunpack.c.l.b16 %v488
          %v617 = vunpack.c.l.b16 %v489
          %v618 = vunpack.c.l.b16 %v490
          %v619 = vpack.c.b16 %v604, %v603
          %v620 = vpack.c.b16 %v606, %v605
          %v621 = vpack.c.b16 %v608, %v607
          %v622 = vpack.c.b16 %v610, %v609
          %v623 = vpack.c.b16 %v612, %v611
          %v624 = vpack.c.b16 %v614, %v613
          %v625 = vpack.c.b16 %v616, %v615
          %v626 = vpack.c.b16 %v618, %v617
          %635 = vmatprep.subr.bf16.mxu0 0
          %636 = vmatpush1.bf16.msra.mxu0 %v619
          %637 = vmatprep.subr.bf16.mxu0 0
          %638 = vmatpush1.bf16.msra.mxu0 %v620
          %639 = vmatprep.subr.bf16.mxu0 0
          %640 = vmatpush1.bf16.msra.mxu0 %v621
          %641 = vmatprep.subr.bf16.mxu0 0
          %642 = vmatpush1.bf16.msra.mxu0 %v622
          %643 = vmatprep.subr.bf16.mxu0 0
          %644 = vmatpush1.bf16.msra.mxu0 %v623
          %645 = vmatprep.subr.bf16.mxu0 0
          %646 = vmatpush1.bf16.msra.mxu0 %v624
          %647 = vmatprep.subr.bf16.mxu0 0
          %648 = vmatpush1.bf16.msra.mxu0 %v625
          %649 = vmatprep.subr.bf16.mxu0 0
          %650 = vmatpush1.bf16.msra.mxu0 %v626
          %651 = vmatprep.subr.bf16.mxu0 0
          %652 = vmatpush1.bf16.msra.mxu0 0
          %653 = vmatprep.subr.bf16.mxu0 0
          %654 = vmatpush1.bf16.msra.mxu0 0
          %655 = vmatprep.subr.bf16.mxu0 0
          %656 = vmatpush1.bf16.msra.mxu0 0
          %657 = vmatprep.subr.bf16.mxu0 0
          %658 = vmatpush1.bf16.msra.mxu0 0
          %659 = vmatprep.subr.bf16.mxu0 0
          %660 = vmatpush1.bf16.msra.mxu0 0
          %661 = vmatprep.subr.bf16.mxu0 0
          %662 = vmatpush1.bf16.msra.mxu0 0
          %663 = vmatprep.subr.bf16.mxu0 0
          %664 = vmatpush1.bf16.msra.mxu0 0
          %665 = vmatprep.subr.bf16.mxu0 0
          %666 = vmatpush1.bf16.msra.mxu0 0
          %667 = vmatprep.mubr.bf16.mxu0 0
          %668 = vmatmul.mubr.bf16.gmra.mrb[0].mxu0 %v555
          %v669 = vpop.f32.mrb[0].mxu0
          %v670 = vadd.f32 0.0, %v669
          %v671 = vpop.f32.mrb[0].mxu0
          %v672 = vpop.f32.mrb[0].mxu0
          %v673 = vadd.f32 0.0, %v672
          %v674 = vpop.f32.mrb[0].mxu0
          %675 = vmatprep.mubr.bf16.mxu0 0
          %676 = vmatmul.mubr.bf16.gmra.mrb[0].mxu0 %v556
          %v677 = vpop.f32.mrb[0].mxu0
          %v678 = vadd.f32 0.0, %v677
          %v679 = vpop.f32.mrb[0].mxu0
          %v680 = vpop.f32.mrb[0].mxu0
          %v681 = vadd.f32 0.0, %v680
          %v682 = vpop.f32.mrb[0].mxu0
          %683 = vmatprep.mubr.bf16.mxu0 0
          %684 = vmatmul.mubr.bf16.gmra.mrb[0].mxu0 %v557
          %v685 = vpop.f32.mrb[0].mxu0
          %v686 = vadd.f32 0.0, %v685
          %v687 = vpop.f32.mrb[0].mxu0
          %v688 = vpop.f32.mrb[0].mxu0
          %v689 = vadd.f32 0.0, %v688
          %v690 = vpop.f32.mrb[0].mxu0
          %691 = vmatprep.mubr.bf16.mxu0 0
          %692 = vmatmul.mubr.bf16.gmra.mrb[0].mxu0 %v558
          %v693 = vpop.f32.mrb[0].mxu0
          %v694 = vadd.f32 0.0, %v693
          %v695 = vpop.f32.mrb[0].mxu0
          %v696 = vpop.f32.mrb[0].mxu0
          %v697 = vadd.f32 0.0, %v696
          %v698 = vpop.f32.mrb[0].mxu0
          %699 = vmatprep.mubr.bf16.mxu0 0
          %700 = vmatmul.mubr.bf16.gmra.mrb[0].mxu0 %v559
          %v701 = vpop.f32.mrb[0].mxu0
          %v702 = vadd.f32 0.0, %v701
          %v703 = vpop.f32.mrb[0].mxu0
          %v704 = vpop.f32.mrb[0].mxu0
          %v705 = vadd.f32 0.0, %v704
          %v706 = vpop.f32.mrb[0].mxu0
          %707 = vmatprep.mubr.bf16.mxu0 0
          %708 = vmatmul.mubr.bf16.gmra.mrb[0].mxu0 %v560
          %v709 = vpop.f32.mrb[0].mxu0
          %v710 = vadd.f32 0.0, %v709
          %v711 = vpop.f32.mrb[0].mxu0
          %v712 = vpop.f32.mrb[0].mxu0
          %v713 = vadd.f32 0.0, %v712
          %v714 = vpop.f32.mrb[0].mxu0
          %715 = vmatprep.mubr.bf16.mxu0 0
          %716 = vmatmul.mubr.bf16.gmra.mrb[0].mxu0 %v561
          %v717 = vpop.f32.mrb[0].mxu0
          %v718 = vadd.f32 0.0, %v717
          %v719 = vpop.f32.mrb[0].mxu0
          %v720 = vpop.f32.mrb[0].mxu0
          %v721 = vadd.f32 0.0, %v720
          %v722 = vpop.f32.mrb[0].mxu0
          %723 = vmatprep.mubr.bf16.mxu0 0
          %724 = vmatmul.mubr.bf16.gmra.mrb[0].mxu0 %v562
          %v725 = vpop.f32.mrb[0].mxu0
          %v726 = vadd.f32 0.0, %v725
          %v727 = vpop.f32.mrb[0].mxu0
          %v728 = vpop.f32.mrb[0].mxu0
          %v729 = vadd.f32 0.0, %v728
          %v730 = vpop.f32.mrb[0].mxu0
          %731 = vmatprep.mubr.bf16.mxu0 0
          %732 = vmatmul.mubr.bf16.gmra.mrb[0].mxu0 %v563
          %v733 = vpop.f32.mrb[0].mxu0
          %v734 = vadd.f32 0.0, %v733
          %v735 = vpop.f32.mrb[0].mxu0
          %v736 = vpop.f32.mrb[0].mxu0
          %v737 = vadd.f32 0.0, %v736
          %v738 = vpop.f32.mrb[0].mxu0
          %739 = vmatprep.mubr.bf16.mxu0 0
          %740 = vmatmul.mubr.bf16.gmra.mrb[0].mxu0 %v564
          %v741 = vpop.f32.mrb[0].mxu0
          %v742 = vadd.f32 0.0, %v741
          %v743 = vpop.f32.mrb[0].mxu0
          %v744 = vpop.f32.mrb[0].mxu0
          %v745 = vadd.f32 0.0, %v744
          %v746 = vpop.f32.mrb[0].mxu0
          %747 = vmatprep.mubr.bf16.mxu0 0
          %748 = vmatmul.mubr.bf16.gmra.mrb[0].mxu0 %v565
          %v749 = vpop.f32.mrb[0].mxu0
          %v750 = vadd.f32 0.0, %v749
          %v751 = vpop.f32.mrb[0].mxu0
          %v752 = vpop.f32.mrb[0].mxu0
          %v753 = vadd.f32 0.0, %v752
          %v754 = vpop.f32.mrb[0].mxu0
          %755 = vmatprep.mubr.bf16.mxu0 0
          %756 = vmatmul.mubr.bf16.gmra.mrb[0].mxu0 %v566
          %v757 = vpop.f32.mrb[0].mxu0
          %v758 = vadd.f32 0.0, %v757
          %v759 = vpop.f32.mrb[0].mxu0
          %v760 = vpop.f32.mrb[0].mxu0
          %v761 = vadd.f32 0.0, %v760
          %v762 = vpop.f32.mrb[0].mxu0
          %763 = vmatprep.mubr.bf16.mxu0 0
          %764 = vmatmul.mubr.bf16.gmra.mrb[0].mxu0 %v567
          %v765 = vpop.f32.mrb[0].mxu0
          %v766 = vadd.f32 0.0, %v765
          %v767 = vpop.f32.mrb[0].mxu0
          %v768 = vpop.f32.mrb[0].mxu0
          %v769 = vadd.f32 0.0, %v768
          %v770 = vpop.f32.mrb[0].mxu0
          %771 = vmatprep.mubr.bf16.mxu0 0
          %772 = vmatmul.mubr.bf16.gmra.mrb[0].mxu0 %v568
          %v773 = vpop.f32.mrb[0].mxu0
          %v774 = vadd.f32 0.0, %v773
          %v775 = vpop.f32.mrb[0].mxu0
          %v776 = vpop.f32.mrb[0].mxu0
          %v777 = vadd.f32 0.0, %v776
          %v778 = vpop.f32.mrb[0].mxu0
          %779 = vmatprep.mubr.bf16.mxu0 0
          %780 = vmatmul.mubr.bf16.gmra.mrb[0].mxu0 %v569
          %v781 = vpop.f32.mrb[0].mxu0
          %v782 = vadd.f32 0.0, %v781
          %v783 = vpop.f32.mrb[0].mxu0
          %v784 = vpop.f32.mrb[0].mxu0
          %v785 = vadd.f32 0.0, %v784
          %v786 = vpop.f32.mrb[0].mxu0
          %787 = vmatprep.mubr.bf16.mxu0 0
          %788 = vmatmul.mubr.bf16.gmra.mrb[0].mxu0 %v570
          %v789 = vpop.f32.mrb[0].mxu0
          %v790 = vadd.f32 0.0, %v789
          %v791 = vpop.f32.mrb[0].mxu0
          %v792 = vpop.f32.mrb[0].mxu0
          %v793 = vadd.f32 0.0, %v792
          %v794 = vpop.f32.mrb[0].mxu0
          %795 = vdwg.mxu0
          %v796 = vld [vmem:[#allocation2] sm:$0xff]
          %v797 = vld [vmem:[#allocation2 + $0x8] sm:$0xff]
          %v798 = vld [vmem:[#allocation2 + $0x10] sm:$0xff]
          %v799 = vld [vmem:[#allocation2 + $0x18] sm:$0xff]
          %v800 = vld [vmem:[#allocation2 + $0x20] sm:$0xff]
          %v801 = vld [vmem:[#allocation2 + $0x28] sm:$0xff]
          %v802 = vld [vmem:[#allocation2 + $0x30] sm:$0xff]
          %v803 = vld [vmem:[#allocation2 + $0x38] sm:$0xff]
          %v804 = vld [vmem:[#allocation2 + $0x40] sm:$0xff]
          %v805 = vld [vmem:[#allocation2 + $0x48] sm:$0xff]
          %v806 = vld [vmem:[#allocation2 + $0x50] sm:$0xff]
          %v807 = vld [vmem:[#allocation2 + $0x58] sm:$0xff]
          %v808 = vld [vmem:[#allocation2 + $0x60] sm:$0xff]
          %v809 = vld [vmem:[#allocation2 + $0x68] sm:$0xff]
          %v810 = vld [vmem:[#allocation2 + $0x70] sm:$0xff]
          %v811 = vld [vmem:[#allocation2 + $0x78] sm:$0xff]
          %v812 = vld [vmem:[#allocation2 + $0x80] sm:$0xff]
          %v813 = vld [vmem:[#allocation2 + $0x88] sm:$0xff]
          %v814 = vld [vmem:[#allocation2 + $0x90] sm:$0xff]
          %v815 = vld [vmem:[#allocation2 + $0x98] sm:$0xff]
          %v816 = vld [vmem:[#allocation2 + $0xa0] sm:$0xff]
          %v817 = vld [vmem:[#allocation2 + $0xa8] sm:$0xff]
          %v818 = vld [vmem:[#allocation2 + $0xb0] sm:$0xff]
          %v819 = vld [vmem:[#allocation2 + $0xb8] sm:$0xff]
          %v820 = vld [vmem:[#allocation2 + $0xc0] sm:$0xff]
          %v821 = vld [vmem:[#allocation2 + $0xc8] sm:$0xff]
          %v822 = vld [vmem:[#allocation2 + $0xd0] sm:$0xff]
          %v823 = vld [vmem:[#allocation2 + $0xd8] sm:$0xff]
          %v824 = vld [vmem:[#allocation2 + $0xe0] sm:$0xff]
          %v825 = vld [vmem:[#allocation2 + $0xe8] sm:$0xff]
          %v826 = vld [vmem:[#allocation2 + $0xf0] sm:$0xff]
          %v827 = vld [vmem:[#allocation2 + $0xf8] sm:$0xff]
          %v828 = vpack.c.bf16 %v673, %v670
          %v829 = vpack.c.bf16 %v681, %v678
          %v830 = vpack.c.bf16 %v689, %v686
          %v831 = vpack.c.bf16 %v697, %v694
          %v832 = vpack.c.bf16 %v705, %v702
          %v833 = vpack.c.bf16 %v713, %v710
          %v834 = vpack.c.bf16 %v721, %v718
          %v835 = vpack.c.bf16 %v729, %v726
          %v836 = vpack.c.bf16 %v737, %v734
          %v837 = vpack.c.bf16 %v745, %v742
          %v838 = vpack.c.bf16 %v753, %v750
          %v839 = vpack.c.bf16 %v761, %v758
          %v840 = vpack.c.bf16 %v769, %v766
          %v841 = vpack.c.bf16 %v777, %v774
          %v842 = vpack.c.bf16 %v785, %v782
          %v843 = vpack.c.bf16 %v793, %v790
          %v876 = vunpack.c.l.b16 %v408
          %v877 = vunpack.c.h.b16 %v408
          %v878 = vunpack.c.l.b16 %v409
          %v879 = vunpack.c.h.b16 %v409
          %v880 = vunpack.c.l.b16 %v410
          %v881 = vunpack.c.h.b16 %v410
          %v882 = vunpack.c.l.b16 %v411
          %v883 = vunpack.c.h.b16 %v411
          %v884 = vunpack.c.l.b16 %v412
          %v885 = vunpack.c.h.b16 %v412
          %v886 = vunpack.c.l.b16 %v413
          %v887 = vunpack.c.h.b16 %v413
          %v888 = vunpack.c.l.b16 %v414
          %v889 = vunpack.c.h.b16 %v414
          %v890 = vunpack.c.l.b16 %v415
          %v891 = vunpack.c.h.b16 %v415
          %v892 = vunpack.c.l.b16 %v416
          %v893 = vunpack.c.h.b16 %v416
          %v894 = vunpack.c.l.b16 %v417
          %v895 = vunpack.c.h.b16 %v417
          %v896 = vunpack.c.l.b16 %v418
          %v897 = vunpack.c.h.b16 %v418
          %v898 = vunpack.c.l.b16 %v419
          %v899 = vunpack.c.h.b16 %v419
          %v900 = vunpack.c.l.b16 %v420
          %v901 = vunpack.c.h.b16 %v420
          %v902 = vunpack.c.l.b16 %v421
          %v903 = vunpack.c.h.b16 %v421
          %v904 = vunpack.c.l.b16 %v422
          %v905 = vunpack.c.h.b16 %v422
          %v906 = vunpack.c.l.b16 %v423
          %v907 = vunpack.c.h.b16 %v423
          %v908 = vunpack.c.l.b16 %v424
          %v909 = vunpack.c.h.b16 %v424
          %v910 = vunpack.c.l.b16 %v425
          %v911 = vunpack.c.h.b16 %v425
          %v912 = vunpack.c.l.b16 %v426
          %v913 = vunpack.c.h.b16 %v426
          %v914 = vunpack.c.l.b16 %v427
          %v915 = vunpack.c.h.b16 %v427
          %v916 = vunpack.c.l.b16 %v428
          %v917 = vunpack.c.h.b16 %v428
          %v918 = vunpack.c.l.b16 %v429
          %v919 = vunpack.c.h.b16 %v429
          %v920 = vunpack.c.l.b16 %v430
          %v921 = vunpack.c.h.b16 %v430
          %v922 = vunpack.c.l.b16 %v431
          %v923 = vunpack.c.h.b16 %v431
          %v924 = vunpack.c.l.b16 %v432
          %v925 = vunpack.c.h.b16 %v432
          %v926 = vunpack.c.l.b16 %v433
          %v927 = vunpack.c.h.b16 %v433
          %v928 = vunpack.c.l.b16 %v434
          %v929 = vunpack.c.h.b16 %v434
          %v930 = vunpack.c.l.b16 %v435
          %v931 = vunpack.c.h.b16 %v435
          %v932 = vunpack.c.l.b16 %v436
          %v933 = vunpack.c.h.b16 %v436
          %v934 = vunpack.c.l.b16 %v437
          %v935 = vunpack.c.h.b16 %v437
          %v936 = vunpack.c.l.b16 %v438
          %v937 = vunpack.c.h.b16 %v438
          %v938 = vunpack.c.l.b16 %v439
          %v939 = vunpack.c.h.b16 %v439
          %v940 = vpack.c.b16 %v878, %v876
          %v941 = vpack.c.b16 %v879, %v877
          %v942 = vpack.c.b16 %v882, %v880
          %v943 = vpack.c.b16 %v883, %v881
          %v944 = vpack.c.b16 %v886, %v884
          %v945 = vpack.c.b16 %v887, %v885
          %v946 = vpack.c.b16 %v890, %v888
          %v947 = vpack.c.b16 %v891, %v889
          %v948 = vpack.c.b16 %v894, %v892
          %v949 = vpack.c.b16 %v895, %v893
          %v950 = vpack.c.b16 %v898, %v896
          %v951 = vpack.c.b16 %v899, %v897
          %v952 = vpack.c.b16 %v902, %v900
          %v953 = vpack.c.b16 %v903, %v901
          %v954 = vpack.c.b16 %v906, %v904
          %v955 = vpack.c.b16 %v907, %v905
          %v956 = vpack.c.b16 %v910, %v908
          %v957 = vpack.c.b16 %v911, %v909
          %v958 = vpack.c.b16 %v914, %v912
          %v959 = vpack.c.b16 %v915, %v913
          %v960 = vpack.c.b16 %v918, %v916
          %v961 = vpack.c.b16 %v919, %v917
          %v962 = vpack.c.b16 %v922, %v920
          %v963 = vpack.c.b16 %v923, %v921
          %v964 = vpack.c.b16 %v926, %v924
          %v965 = vpack.c.b16 %v927, %v925
          %v966 = vpack.c.b16 %v930, %v928
          %v967 = vpack.c.b16 %v931, %v929
          %v968 = vpack.c.b16 %v934, %v932
          %v969 = vpack.c.b16 %v935, %v933
          %v970 = vpack.c.b16 %v938, %v936
          %v971 = vpack.c.b16 %v939, %v937
          %1004 = vmatprep.subr.bf16.mxu0 0
          %1005 = vmatpush1.bf16.msra.mxu0 %v828
          %1006 = vmatprep.subr.bf16.mxu0 0
          %1007 = vmatpush1.bf16.msra.mxu0 %v829
          %1008 = vmatprep.subr.bf16.mxu0 0
          %1009 = vmatpush1.bf16.msra.mxu0 %v830
          %1010 = vmatprep.subr.bf16.mxu0 0
          %1011 = vmatpush1.bf16.msra.mxu0 %v831
          %1012 = vmatprep.subr.bf16.mxu0 0
          %1013 = vmatpush1.bf16.msra.mxu0 %v832
          %1014 = vmatprep.subr.bf16.mxu0 0
          %1015 = vmatpush1.bf16.msra.mxu0 %v833
          %1016 = vmatprep.subr.bf16.mxu0 0
          %1017 = vmatpush1.bf16.msra.mxu0 %v834
          %1018 = vmatprep.subr.bf16.mxu0 0
          %1019 = vmatpush1.bf16.msra.mxu0 %v835
          %1020 = vmatprep.subr.bf16.mxu0 0
          %1021 = vmatpush1.bf16.msra.mxu0 %v836
          %1022 = vmatprep.subr.bf16.mxu0 0
          %1023 = vmatpush1.bf16.msra.mxu0 %v837
          %1024 = vmatprep.subr.bf16.mxu0 0
          %1025 = vmatpush1.bf16.msra.mxu0 %v838
          %1026 = vmatprep.subr.bf16.mxu0 0
          %1027 = vmatpush1.bf16.msra.mxu0 %v839
          %1028 = vmatprep.subr.bf16.mxu0 0
          %1029 = vmatpush1.bf16.msra.mxu0 %v840
          %1030 = vmatprep.subr.bf16.mxu0 0
          %1031 = vmatpush1.bf16.msra.mxu0 %v841
          %1032 = vmatprep.subr.bf16.mxu0 0
          %1033 = vmatpush1.bf16.msra.mxu0 %v842
          %1034 = vmatprep.subr.bf16.mxu0 0
          %1035 = vmatpush1.bf16.msra.mxu0 %v843
          %1036 = vmatprep.mubr.bf16.mxu0 %v941
          %1037 = vmatmul.mubr.bf16.gmra.mrb[0].mxu0 %v940
          %v1038 = vpop.f32.mrb[0].mxu0
          %v1039 = vadd.f32 0.0, %v1038
          %v1040 = vpop.f32.mrb[0].mxu0
          %v1041 = vpop.f32.mrb[0].mxu0
          %v1042 = vadd.f32 0.0, %v1041
          %v1043 = vpop.f32.mrb[0].mxu0
          %1044 = vmatprep.mubr.bf16.mxu0 %v943
          %1045 = vmatmul.mubr.bf16.gmra.mrb[0].mxu0 %v942
          %v1046 = vpop.f32.mrb[0].mxu0
          %v1047 = vadd.f32 0.0, %v1046
          %v1048 = vpop.f32.mrb[0].mxu0
          %v1049 = vpop.f32.mrb[0].mxu0
          %v1050 = vadd.f32 0.0, %v1049
          %v1051 = vpop.f32.mrb[0].mxu0
          %1052 = vmatprep.mubr.bf16.mxu0 %v945
          %1053 = vmatmul.mubr.bf16.gmra.mrb[0].mxu0 %v944
          %v1054 = vpop.f32.mrb[0].mxu0
          %v1055 = vadd.f32 0.0, %v1054
          %v1056 = vpop.f32.mrb[0].mxu0
          %v1057 = vpop.f32.mrb[0].mxu0
          %v1058 = vadd.f32 0.0, %v1057
          %v1059 = vpop.f32.mrb[0].mxu0
          %1060 = vmatprep.mubr.bf16.mxu0 %v947
          %1061 = vmatmul.mubr.bf16.gmra.mrb[0].mxu0 %v946
          %v1062 = vpop.f32.mrb[0].mxu0
          %v1063 = vadd.f32 0.0, %v1062
          %v1064 = vpop.f32.mrb[0].mxu0
          %v1065 = vpop.f32.mrb[0].mxu0
          %v1066 = vadd.f32 0.0, %v1065
          %v1067 = vpop.f32.mrb[0].mxu0
          %1068 = vmatprep.mubr.bf16.mxu0 %v949
          %1069 = vmatmul.mubr.bf16.gmra.mrb[0].mxu0 %v948
          %v1070 = vpop.f32.mrb[0].mxu0
          %v1071 = vadd.f32 0.0, %v1070
          %v1072 = vpop.f32.mrb[0].mxu0
          %v1073 = vpop.f32.mrb[0].mxu0
          %v1074 = vadd.f32 0.0, %v1073
          %v1075 = vpop.f32.mrb[0].mxu0
          %1076 = vmatprep.mubr.bf16.mxu0 %v951
          %1077 = vmatmul.mubr.bf16.gmra.mrb[0].mxu0 %v950
          %v1078 = vpop.f32.mrb[0].mxu0
          %v1079 = vadd.f32 0.0, %v1078
          %v1080 = vpop.f32.mrb[0].mxu0
          %v1081 = vpop.f32.mrb[0].mxu0
          %v1082 = vadd.f32 0.0, %v1081
          %v1083 = vpop.f32.mrb[0].mxu0
          %1084 = vmatprep.mubr.bf16.mxu0 %v953
          %1085 = vmatmul.mubr.bf16.gmra.mrb[0].mxu0 %v952
          %v1086 = vpop.f32.mrb[0].mxu0
          %v1087 = vadd.f32 0.0, %v1086
          %v1088 = vpop.f32.mrb[0].mxu0
          %v1089 = vpop.f32.mrb[0].mxu0
          %v1090 = vadd.f32 0.0, %v1089
          %v1091 = vpop.f32.mrb[0].mxu0
          %1092 = vmatprep.mubr.bf16.mxu0 %v955
          %1093 = vmatmul.mubr.bf16.gmra.mrb[0].mxu0 %v954
          %v1094 = vpop.f32.mrb[0].mxu0
          %v1095 = vadd.f32 0.0, %v1094
          %v1096 = vpop.f32.mrb[0].mxu0
          %v1097 = vpop.f32.mrb[0].mxu0
          %v1098 = vadd.f32 0.0, %v1097
          %v1099 = vpop.f32.mrb[0].mxu0
          %1100 = vmatprep.mubr.bf16.mxu0 %v957
          %1101 = vmatmul.mubr.bf16.gmra.mrb[0].mxu0 %v956
          %v1102 = vpop.f32.mrb[0].mxu0
          %v1103 = vadd.f32 0.0, %v1102
          %v1104 = vpop.f32.mrb[0].mxu0
          %v1105 = vpop.f32.mrb[0].mxu0
          %v1106 = vadd.f32 0.0, %v1105
          %v1107 = vpop.f32.mrb[0].mxu0
          %1108 = vmatprep.mubr.bf16.mxu0 %v959
          %1109 = vmatmul.mubr.bf16.gmra.mrb[0].mxu0 %v958
          %v1110 = vpop.f32.mrb[0].mxu0
          %v1111 = vadd.f32 0.0, %v1110
          %v1112 = vpop.f32.mrb[0].mxu0
          %v1113 = vpop.f32.mrb[0].mxu0
          %v1114 = vadd.f32 0.0, %v1113
          %v1115 = vpop.f32.mrb[0].mxu0
          %1116 = vmatprep.mubr.bf16.mxu0 %v961
          %1117 = vmatmul.mubr.bf16.gmra.mrb[0].mxu0 %v960
          %v1118 = vpop.f32.mrb[0].mxu0
          %v1119 = vadd.f32 0.0, %v1118
          %v1120 = vpop.f32.mrb[0].mxu0
          %v1121 = vpop.f32.mrb[0].mxu0
          %v1122 = vadd.f32 0.0, %v1121
          %v1123 = vpop.f32.mrb[0].mxu0
          %1124 = vmatprep.mubr.bf16.mxu0 %v963
          %1125 = vmatmul.mubr.bf16.gmra.mrb[0].mxu0 %v962
          %v1126 = vpop.f32.mrb[0].mxu0
          %v1127 = vadd.f32 0.0, %v1126
          %v1128 = vpop.f32.mrb[0].mxu0
          %v1129 = vpop.f32.mrb[0].mxu0
          %v1130 = vadd.f32 0.0, %v1129
          %v1131 = vpop.f32.mrb[0].mxu0
          %1132 = vmatprep.mubr.bf16.mxu0 %v965
          %1133 = vmatmul.mubr.bf16.gmra.mrb[0].mxu0 %v964
          %v1134 = vpop.f32.mrb[0].mxu0
          %v1135 = vadd.f32 0.0, %v1134
          %v1136 = vpop.f32.mrb[0].mxu0
          %v1137 = vpop.f32.mrb[0].mxu0
          %v1138 = vadd.f32 0.0, %v1137
          %v1139 = vpop.f32.mrb[0].mxu0
          %1140 = vmatprep.mubr.bf16.mxu0 %v967
          %1141 = vmatmul.mubr.bf16.gmra.mrb[0].mxu0 %v966
          %v1142 = vpop.f32.mrb[0].mxu0
          %v1143 = vadd.f32 0.0, %v1142
          %v1144 = vpop.f32.mrb[0].mxu0
          %v1145 = vpop.f32.mrb[0].mxu0
          %v1146 = vadd.f32 0.0, %v1145
          %v1147 = vpop.f32.mrb[0].mxu0
          %1148 = vmatprep.mubr.bf16.mxu0 %v969
          %1149 = vmatmul.mubr.bf16.gmra.mrb[0].mxu0 %v968
          %v1150 = vpop.f32.mrb[0].mxu0
          %v1151 = vadd.f32 0.0, %v1150
          %v1152 = vpop.f32.mrb[0].mxu0
          %v1153 = vpop.f32.mrb[0].mxu0
          %v1154 = vadd.f32 0.0, %v1153
          %v1155 = vpop.f32.mrb[0].mxu0
          %1156 = vmatprep.mubr.bf16.mxu0 %v971
          %1157 = vmatmul.mubr.bf16.gmra.mrb[0].mxu0 %v970
          %v1158 = vpop.f32.mrb[0].mxu0
          %v1159 = vadd.f32 0.0, %v1158
          %v1160 = vpop.f32.mrb[0].mxu0
          %v1161 = vpop.f32.mrb[0].mxu0
          %v1162 = vadd.f32 0.0, %v1161
          %v1163 = vpop.f32.mrb[0].mxu0
          %1164 = vdwg.mxu0
          %v1165 = vadd.f32 %v796, %v1039
          %v1166 = vadd.f32 %v797, %v1042
          %v1167 = vadd.f32 %v798, %v1047
          %v1168 = vadd.f32 %v799, %v1050
          %v1169 = vadd.f32 %v800, %v1055
          %v1170 = vadd.f32 %v801, %v1058
          %v1171 = vadd.f32 %v802, %v1063
          %v1172 = vadd.f32 %v803, %v1066
          %v1173 = vadd.f32 %v804, %v1071
          %v1174 = vadd.f32 %v805, %v1074
          %v1175 = vadd.f32 %v806, %v1079
          %v1176 = vadd.f32 %v807, %v1082
          %v1177 = vadd.f32 %v808, %v1087
          %v1178 = vadd.f32 %v809, %v1090
          %v1179 = vadd.f32 %v810, %v1095
          %v1180 = vadd.f32 %v811, %v1098
          %v1181 = vadd.f32 %v812, %v1103
          %v1182 = vadd.f32 %v813, %v1106
          %v1183 = vadd.f32 %v814, %v1111
          %v1184 = vadd.f32 %v815, %v1114
          %v1185 = vadd.f32 %v816, %v1119
          %v1186 = vadd.f32 %v817, %v1122
          %v1187 = vadd.f32 %v818, %v1127
          %v1188 = vadd.f32 %v819, %v1130
          %v1189 = vadd.f32 %v820, %v1135
          %v1190 = vadd.f32 %v821, %v1138
          %v1191 = vadd.f32 %v822, %v1143
          %v1192 = vadd.f32 %v823, %v1146
          %v1193 = vadd.f32 %v824, %v1151
          %v1194 = vadd.f32 %v825, %v1154
          %v1195 = vadd.f32 %v826, %v1159
          %v1196 = vadd.f32 %v827, %v1162
          %1197 = vst [vmem:[#allocation2] sm:$0xff] %v1165
          %1198 = vst [vmem:[#allocation2 + $0x8] sm:$0xff] %v1166
          %1199 = vst [vmem:[#allocation2 + $0x10] sm:$0xff] %v1167
          %1200 = vst [vmem:[#allocation2 + $0x18] sm:$0xff] %v1168
          %1201 = vst [vmem:[#allocation2 + $0x20] sm:$0xff] %v1169
          %1202 = vst [vmem:[#allocation2 + $0x28] sm:$0xff] %v1170
          %1203 = vst [vmem:[#allocation2 + $0x30] sm:$0xff] %v1171
          %1204 = vst [vmem:[#allocation2 + $0x38] sm:$0xff] %v1172
          %1205 = vst [vmem:[#allocation2 + $0x40] sm:$0xff] %v1173
          %1206 = vst [vmem:[#allocation2 + $0x48] sm:$0xff] %v1174
          %1207 = vst [vmem:[#allocation2 + $0x50] sm:$0xff] %v1175
          %1208 = vst [vmem:[#allocation2 + $0x58] sm:$0xff] %v1176
          %1209 = vst [vmem:[#allocation2 + $0x60] sm:$0xff] %v1177
          %1210 = vst [vmem:[#allocation2 + $0x68] sm:$0xff] %v1178
          %1211 = vst [vmem:[#allocation2 + $0x70] sm:$0xff] %v1179
          %1212 = vst [vmem:[#allocation2 + $0x78] sm:$0xff] %v1180
          %1213 = vst [vmem:[#allocation2 + $0x80] sm:$0xff] %v1181
          %1214 = vst [vmem:[#allocation2 + $0x88] sm:$0xff] %v1182
          %1215 = vst [vmem:[#allocation2 + $0x90] sm:$0xff] %v1183
          %1216 = vst [vmem:[#allocation2 + $0x98] sm:$0xff] %v1184
          %1217 = vst [vmem:[#allocation2 + $0xa0] sm:$0xff] %v1185
          %1218 = vst [vmem:[#allocation2 + $0xa8] sm:$0xff] %v1186
          %1219 = vst [vmem:[#allocation2 + $0xb0] sm:$0xff] %v1187
          %1220 = vst [vmem:[#allocation2 + $0xb8] sm:$0xff] %v1188
          %1221 = vst [vmem:[#allocation2 + $0xc0] sm:$0xff] %v1189
          %1222 = vst [vmem:[#allocation2 + $0xc8] sm:$0xff] %v1190
          %1223 = vst [vmem:[#allocation2 + $0xd0] sm:$0xff] %v1191
          %1224 = vst [vmem:[#allocation2 + $0xd8] sm:$0xff] %v1192
          %1225 = vst [vmem:[#allocation2 + $0xe0] sm:$0xff] %v1193
          %1226 = vst [vmem:[#allocation2 + $0xe8] sm:$0xff] %v1194
          %1227 = vst [vmem:[#allocation2 + $0xf0] sm:$0xff] %v1195
          %1228 = vst [vmem:[#allocation2 + $0xf8] sm:$0xff] %v1196
        $region72: #{tpu_custom_call.1} parent=43 // pred_fallthru
          _
        // Predicated region
        $region73: #{tpu_custom_call.1} parent=43 // pred_check
          %p1229 = pneg %p371
        $region74: #{tpu_custom_call.1} parent=43 // pred_check_branch
          %1231 = sbr.rel (%p1229) target = $region76
        $region75: #{tpu_custom_call.1} parent=43 // pred_region
          %s1232 = smul.u32 %s28, 256
          %s1233 = scalar_lea.vmem [#allocation2], %s1232
          %v1234 = vld [vmem:[%s1233] sm:$0xff]
          %v1235 = vld [vmem:[%s1233 + $0x8] sm:$0xff]
          %v1236 = vld [vmem:[%s1233 + $0x10] sm:$0xff]
          %v1237 = vld [vmem:[%s1233 + $0x18] sm:$0xff]
          %v1238 = vld [vmem:[%s1233 + $0x20] sm:$0xff]
          %v1239 = vld [vmem:[%s1233 + $0x28] sm:$0xff]
          %v1240 = vld [vmem:[%s1233 + $0x30] sm:$0xff]
          %v1241 = vld [vmem:[%s1233 + $0x38] sm:$0xff]
          %v1242 = vld [vmem:[%s1233 + $0x40] sm:$0xff]
          %v1243 = vld [vmem:[%s1233 + $0x48] sm:$0xff]
          %v1244 = vld [vmem:[%s1233 + $0x50] sm:$0xff]
          %v1245 = vld [vmem:[%s1233 + $0x58] sm:$0xff]
          %v1246 = vld [vmem:[%s1233 + $0x60] sm:$0xff]
          %v1247 = vld [vmem:[%s1233 + $0x68] sm:$0xff]
          %v1248 = vld [vmem:[%s1233 + $0x70] sm:$0xff]
          %v1249 = vld [vmem:[%s1233 + $0x78] sm:$0xff]
          %v1250 = vld [vmem:[%s1233 + $0x80] sm:$0xff]
          %v1251 = vld [vmem:[%s1233 + $0x88] sm:$0xff]
          %v1252 = vld [vmem:[%s1233 + $0x90] sm:$0xff]
          %v1253 = vld [vmem:[%s1233 + $0x98] sm:$0xff]
          %v1254 = vld [vmem:[%s1233 + $0xa0] sm:$0xff]
          %v1255 = vld [vmem:[%s1233 + $0xa8] sm:$0xff]
          %v1256 = vld [vmem:[%s1233 + $0xb0] sm:$0xff]
          %v1257 = vld [vmem:[%s1233 + $0xb8] sm:$0xff]
          %v1258 = vld [vmem:[%s1233 + $0xc0] sm:$0xff]
          %v1259 = vld [vmem:[%s1233 + $0xc8] sm:$0xff]
          %v1260 = vld [vmem:[%s1233 + $0xd0] sm:$0xff]
          %v1261 = vld [vmem:[%s1233 + $0xd8] sm:$0xff]
          %v1262 = vld [vmem:[%s1233 + $0xe0] sm:$0xff]
          %v1263 = vld [vmem:[%s1233 + $0xe8] sm:$0xff]
          %v1264 = vld [vmem:[%s1233 + $0xf0] sm:$0xff]
          %v1265 = vld [vmem:[%s1233 + $0xf8] sm:$0xff]
          %v1266 = vpack.c.bf16 %v1235, %v1234
          %v1267 = vpack.c.bf16 %v1237, %v1236
          %v1268 = vpack.c.bf16 %v1239, %v1238
          %v1269 = vpack.c.bf16 %v1241, %v1240
          %v1270 = vpack.c.bf16 %v1243, %v1242
          %v1271 = vpack.c.bf16 %v1245, %v1244
          %v1272 = vpack.c.bf16 %v1247, %v1246
          %v1273 = vpack.c.bf16 %v1249, %v1248
          %v1274 = vpack.c.bf16 %v1251, %v1250
          %v1275 = vpack.c.bf16 %v1253, %v1252
          %v1276 = vpack.c.bf16 %v1255, %v1254
          %v1277 = vpack.c.bf16 %v1257, %v1256
          %v1278 = vpack.c.bf16 %v1259, %v1258
          %v1279 = vpack.c.bf16 %v1261, %v1260
          %v1280 = vpack.c.bf16 %v1263, %v1262
          %v1281 = vpack.c.bf16 %v1265, %v1264
          %v1282 = vld [vmem:[#allocation9] sm:$0xf]
          %v1283 = vld [vmem:[#allocation9 + $0x4] sm:$0xf]
          %v1284 = vld [vmem:[#allocation9 + $0x8] sm:$0xf]
          %v1285 = vld [vmem:[#allocation9 + $0xc] sm:$0xf]
          %v1286 = vld [vmem:[#allocation9 + $0x10] sm:$0xf]
          %v1287 = vld [vmem:[#allocation9 + $0x14] sm:$0xf]
          %v1288 = vld [vmem:[#allocation9 + $0x18] sm:$0xf]
          %v1289 = vld [vmem:[#allocation9 + $0x1c] sm:$0xf]
          %v1290 = vld [vmem:[#allocation9 + $0x20] sm:$0xf]
          %v1291 = vld [vmem:[#allocation9 + $0x24] sm:$0xf]
          %v1292 = vld [vmem:[#allocation9 + $0x28] sm:$0xf]
          %v1293 = vld [vmem:[#allocation9 + $0x2c] sm:$0xf]
          %v1294 = vld [vmem:[#allocation9 + $0x30] sm:$0xf]
          %v1295 = vld [vmem:[#allocation9 + $0x34] sm:$0xf]
          %v1296 = vld [vmem:[#allocation9 + $0x38] sm:$0xf]
          %v1297 = vld [vmem:[#allocation9 + $0x3c] sm:$0xf]
          %v1314 = vunpack.c.l.b16 %v1282
          %v1315 = vunpack.c.l.b16 %v1283
          %v1316 = vunpack.c.l.b16 %v1284
          %v1317 = vunpack.c.l.b16 %v1285
          %v1318 = vunpack.c.l.b16 %v1286
          %v1319 = vunpack.c.l.b16 %v1287
          %v1320 = vunpack.c.l.b16 %v1288
          %v1321 = vunpack.c.l.b16 %v1289
          %v1322 = vunpack.c.l.b16 %v1290
          %v1323 = vunpack.c.l.b16 %v1291
          %v1324 = vunpack.c.l.b16 %v1292
          %v1325 = vunpack.c.l.b16 %v1293
          %v1326 = vunpack.c.l.b16 %v1294
          %v1327 = vunpack.c.l.b16 %v1295
          %v1328 = vunpack.c.l.b16 %v1296
          %v1329 = vunpack.c.l.b16 %v1297
          %v1330 = vpack.c.b16 %v1315, %v1314
          %v1331 = vpack.c.b16 %v1317, %v1316
          %v1332 = vpack.c.b16 %v1319, %v1318
          %v1333 = vpack.c.b16 %v1321, %v1320
          %v1334 = vpack.c.b16 %v1323, %v1322
          %v1335 = vpack.c.b16 %v1325, %v1324
          %v1336 = vpack.c.b16 %v1327, %v1326
          %v1337 = vpack.c.b16 %v1329, %v1328
          %1346 = vmatprep.subr.bf16.mxu0 0
          %1347 = vmatpush1.bf16.msra.mxu0 %v1330
          %1348 = vmatprep.subr.bf16.mxu0 0
          %1349 = vmatpush1.bf16.msra.mxu0 %v1331
          %1350 = vmatprep.subr.bf16.mxu0 0
          %1351 = vmatpush1.bf16.msra.mxu0 %v1332
          %1352 = vmatprep.subr.bf16.mxu0 0
          %1353 = vmatpush1.bf16.msra.mxu0 %v1333
          %1354 = vmatprep.subr.bf16.mxu0 0
          %1355 = vmatpush1.bf16.msra.mxu0 %v1334
          %1356 = vmatprep.subr.bf16.mxu0 0
          %1357 = vmatpush1.bf16.msra.mxu0 %v1335
          %1358 = vmatprep.subr.bf16.mxu0 0
          %1359 = vmatpush1.bf16.msra.mxu0 %v1336
          %1360 = vmatprep.subr.bf16.mxu0 0
          %1361 = vmatpush1.bf16.msra.mxu0 %v1337
          %1362 = vmatprep.subr.bf16.mxu0 0
          %1363 = vmatpush1.bf16.msra.mxu0 0
          %1364 = vmatprep.subr.bf16.mxu0 0
          %1365 = vmatpush1.bf16.msra.mxu0 0
          %1366 = vmatprep.subr.bf16.mxu0 0
          %1367 = vmatpush1.bf16.msra.mxu0 0
          %1368 = vmatprep.subr.bf16.mxu0 0
          %1369 = vmatpush1.bf16.msra.mxu0 0
          %1370 = vmatprep.subr.bf16.mxu0 0
          %1371 = vmatpush1.bf16.msra.mxu0 0
          %1372 = vmatprep.subr.bf16.mxu0 0
          %1373 = vmatpush1.bf16.msra.mxu0 0
          %1374 = vmatprep.subr.bf16.mxu0 0
          %1375 = vmatpush1.bf16.msra.mxu0 0
          %1376 = vmatprep.subr.bf16.mxu0 0
          %1377 = vmatpush1.bf16.msra.mxu0 0
          %1378 = vmatprep.mubr.bf16.mxu0 0
          %1379 = vmatmul.mubr.bf16.gmra.mrb[0].mxu0 %v1266
          %v1380 = vpop.f32.mrb[0].mxu0
          %v1381 = vadd.f32 0.0, %v1380
          %v1382 = vpop.f32.mrb[0].mxu0
          %v1383 = vpop.f32.mrb[0].mxu0
          %v1384 = vadd.f32 0.0, %v1383
          %v1385 = vpop.f32.mrb[0].mxu0
          %1386 = vmatprep.mubr.bf16.mxu0 0
          %1387 = vmatmul.mubr.bf16.gmra.mrb[0].mxu0 %v1267
          %v1388 = vpop.f32.mrb[0].mxu0
          %v1389 = vadd.f32 0.0, %v1388
          %v1390 = vpop.f32.mrb[0].mxu0
          %v1391 = vpop.f32.mrb[0].mxu0
          %v1392 = vadd.f32 0.0, %v1391
          %v1393 = vpop.f32.mrb[0].mxu0
          %1394 = vmatprep.mubr.bf16.mxu0 0
          %1395 = vmatmul.mubr.bf16.gmra.mrb[0].mxu0 %v1268
          %v1396 = vpop.f32.mrb[0].mxu0
          %v1397 = vadd.f32 0.0, %v1396
          %v1398 = vpop.f32.mrb[0].mxu0
          %v1399 = vpop.f32.mrb[0].mxu0
          %v1400 = vadd.f32 0.0, %v1399
          %v1401 = vpop.f32.mrb[0].mxu0
          %1402 = vmatprep.mubr.bf16.mxu0 0
          %1403 = vmatmul.mubr.bf16.gmra.mrb[0].mxu0 %v1269
          %v1404 = vpop.f32.mrb[0].mxu0
          %v1405 = vadd.f32 0.0, %v1404
          %v1406 = vpop.f32.mrb[0].mxu0
          %v1407 = vpop.f32.mrb[0].mxu0
          %v1408 = vadd.f32 0.0, %v1407
          %v1409 = vpop.f32.mrb[0].mxu0
          %1410 = vmatprep.mubr.bf16.mxu0 0
          %1411 = vmatmul.mubr.bf16.gmra.mrb[0].mxu0 %v1270
          %v1412 = vpop.f32.mrb[0].mxu0
          %v1413 = vadd.f32 0.0, %v1412
          %v1414 = vpop.f32.mrb[0].mxu0
          %v1415 = vpop.f32.mrb[0].mxu0
          %v1416 = vadd.f32 0.0, %v1415
          %v1417 = vpop.f32.mrb[0].mxu0
          %1418 = vmatprep.mubr.bf16.mxu0 0
          %1419 = vmatmul.mubr.bf16.gmra.mrb[0].mxu0 %v1271
          %v1420 = vpop.f32.mrb[0].mxu0
          %v1421 = vadd.f32 0.0, %v1420
          %v1422 = vpop.f32.mrb[0].mxu0
          %v1423 = vpop.f32.mrb[0].mxu0
          %v1424 = vadd.f32 0.0, %v1423
          %v1425 = vpop.f32.mrb[0].mxu0
          %1426 = vmatprep.mubr.bf16.mxu0 0
          %1427 = vmatmul.mubr.bf16.gmra.mrb[0].mxu0 %v1272
          %v1428 = vpop.f32.mrb[0].mxu0
          %v1429 = vadd.f32 0.0, %v1428
          %v1430 = vpop.f32.mrb[0].mxu0
          %v1431 = vpop.f32.mrb[0].mxu0
          %v1432 = vadd.f32 0.0, %v1431
          %v1433 = vpop.f32.mrb[0].mxu0
          %1434 = vmatprep.mubr.bf16.mxu0 0
          %1435 = vmatmul.mubr.bf16.gmra.mrb[0].mxu0 %v1273
          %v1436 = vpop.f32.mrb[0].mxu0
          %v1437 = vadd.f32 0.0, %v1436
          %v1438 = vpop.f32.mrb[0].mxu0
          %v1439 = vpop.f32.mrb[0].mxu0
          %v1440 = vadd.f32 0.0, %v1439
          %v1441 = vpop.f32.mrb[0].mxu0
          %1442 = vmatprep.mubr.bf16.mxu0 0
          %1443 = vmatmul.mubr.bf16.gmra.mrb[0].mxu0 %v1274
          %v1444 = vpop.f32.mrb[0].mxu0
          %v1445 = vadd.f32 0.0, %v1444
          %v1446 = vpop.f32.mrb[0].mxu0
          %v1447 = vpop.f32.mrb[0].mxu0
          %v1448 = vadd.f32 0.0, %v1447
          %v1449 = vpop.f32.mrb[0].mxu0
          %1450 = vmatprep.mubr.bf16.mxu0 0
          %1451 = vmatmul.mubr.bf16.gmra.mrb[0].mxu0 %v1275
          %v1452 = vpop.f32.mrb[0].mxu0
          %v1453 = vadd.f32 0.0, %v1452
          %v1454 = vpop.f32.mrb[0].mxu0
          %v1455 = vpop.f32.mrb[0].mxu0
          %v1456 = vadd.f32 0.0, %v1455
          %v1457 = vpop.f32.mrb[0].mxu0
          %1458 = vmatprep.mubr.bf16.mxu0 0
          %1459 = vmatmul.mubr.bf16.gmra.mrb[0].mxu0 %v1276
          %v1460 = vpop.f32.mrb[0].mxu0
          %v1461 = vadd.f32 0.0, %v1460
          %v1462 = vpop.f32.mrb[0].mxu0
          %v1463 = vpop.f32.mrb[0].mxu0
          %v1464 = vadd.f32 0.0, %v1463
          %v1465 = vpop.f32.mrb[0].mxu0
          %1466 = vmatprep.mubr.bf16.mxu0 0
          %1467 = vmatmul.mubr.bf16.gmra.mrb[0].mxu0 %v1277
          %v1468 = vpop.f32.mrb[0].mxu0
          %v1469 = vadd.f32 0.0, %v1468
          %v1470 = vpop.f32.mrb[0].mxu0
          %v1471 = vpop.f32.mrb[0].mxu0
          %v1472 = vadd.f32 0.0, %v1471
          %v1473 = vpop.f32.mrb[0].mxu0
          %1474 = vmatprep.mubr.bf16.mxu0 0
          %1475 = vmatmul.mubr.bf16.gmra.mrb[0].mxu0 %v1278
          %v1476 = vpop.f32.mrb[0].mxu0
          %v1477 = vadd.f32 0.0, %v1476
          %v1478 = vpop.f32.mrb[0].mxu0
          %v1479 = vpop.f32.mrb[0].mxu0
          %v1480 = vadd.f32 0.0, %v1479
          %v1481 = vpop.f32.mrb[0].mxu0
          %1482 = vmatprep.mubr.bf16.mxu0 0
          %1483 = vmatmul.mubr.bf16.gmra.mrb[0].mxu0 %v1279
          %v1484 = vpop.f32.mrb[0].mxu0
          %v1485 = vadd.f32 0.0, %v1484
          %v1486 = vpop.f32.mrb[0].mxu0
          %v1487 = vpop.f32.mrb[0].mxu0
          %v1488 = vadd.f32 0.0, %v1487
          %v1489 = vpop.f32.mrb[0].mxu0
          %1490 = vmatprep.mubr.bf16.mxu0 0
          %1491 = vmatmul.mubr.bf16.gmra.mrb[0].mxu0 %v1280
          %v1492 = vpop.f32.mrb[0].mxu0
          %v1493 = vadd.f32 0.0, %v1492
          %v1494 = vpop.f32.mrb[0].mxu0
          %v1495 = vpop.f32.mrb[0].mxu0
          %v1496 = vadd.f32 0.0, %v1495
          %v1497 = vpop.f32.mrb[0].mxu0
          %1498 = vmatprep.mubr.bf16.mxu0 0
          %1499 = vmatmul.mubr.bf16.gmra.mrb[0].mxu0 %v1281
          %v1500 = vpop.f32.mrb[0].mxu0
          %v1501 = vadd.f32 0.0, %v1500
          %v1502 = vpop.f32.mrb[0].mxu0
          %v1503 = vpop.f32.mrb[0].mxu0
          %v1504 = vadd.f32 0.0, %v1503
          %v1505 = vpop.f32.mrb[0].mxu0
          %1506 = vdwg.mxu0
          %v1507 = vld [vmem:[#allocation11] sm:$0xff]
          %v1508 = vld [vmem:[#allocation11 + $0x8] sm:$0xff]
          %v1509 = vld [vmem:[#allocation11 + $0x10] sm:$0xff]
          %v1510 = vld [vmem:[#allocation11 + $0x18] sm:$0xff]
          %v1511 = vld [vmem:[#allocation11 + $0x20] sm:$0xff]
          %v1512 = vld [vmem:[#allocation11 + $0x28] sm:$0xff]
          %v1513 = vld [vmem:[#allocation11 + $0x30] sm:$0xff]
          %v1514 = vld [vmem:[#allocation11 + $0x38] sm:$0xff]
          %v1515 = vld [vmem:[#allocation11 + $0x40] sm:$0xff]
          %v1516 = vld [vmem:[#allocation11 + $0x48] sm:$0xff]
          %v1517 = vld [vmem:[#allocation11 + $0x50] sm:$0xff]
          %v1518 = vld [vmem:[#allocation11 + $0x58] sm:$0xff]
          %v1519 = vld [vmem:[#allocation11 + $0x60] sm:$0xff]
          %v1520 = vld [vmem:[#allocation11 + $0x68] sm:$0xff]
          %v1521 = vld [vmem:[#allocation11 + $0x70] sm:$0xff]
          %v1522 = vld [vmem:[#allocation11 + $0x78] sm:$0xff]
          %v1523 = vld [vmem:[#allocation11 + $0x80] sm:$0xff]
          %v1524 = vld [vmem:[#allocation11 + $0x88] sm:$0xff]
          %v1525 = vld [vmem:[#allocation11 + $0x90] sm:$0xff]
          %v1526 = vld [vmem:[#allocation11 + $0x98] sm:$0xff]
          %v1527 = vld [vmem:[#allocation11 + $0xa0] sm:$0xff]
          %v1528 = vld [vmem:[#allocation11 + $0xa8] sm:$0xff]
          %v1529 = vld [vmem:[#allocation11 + $0xb0] sm:$0xff]
          %v1530 = vld [vmem:[#allocation11 + $0xb8] sm:$0xff]
          %v1531 = vld [vmem:[#allocation11 + $0xc0] sm:$0xff]
          %v1532 = vld [vmem:[#allocation11 + $0xc8] sm:$0xff]
          %v1533 = vld [vmem:[#allocation11 + $0xd0] sm:$0xff]
          %v1534 = vld [vmem:[#allocation11 + $0xd8] sm:$0xff]
          %v1535 = vld [vmem:[#allocation11 + $0xe0] sm:$0xff]
          %v1536 = vld [vmem:[#allocation11 + $0xe8] sm:$0xff]
          %v1537 = vld [vmem:[#allocation11 + $0xf0] sm:$0xff]
          %v1538 = vld [vmem:[#allocation11 + $0xf8] sm:$0xff]
          %v1539 = vpack.c.bf16 %v1384, %v1381
          %v1540 = vpack.c.bf16 %v1392, %v1389
          %v1541 = vpack.c.bf16 %v1400, %v1397
          %v1542 = vpack.c.bf16 %v1408, %v1405
          %v1543 = vpack.c.bf16 %v1416, %v1413
          %v1544 = vpack.c.bf16 %v1424, %v1421
          %v1545 = vpack.c.bf16 %v1432, %v1429
          %v1546 = vpack.c.bf16 %v1440, %v1437
          %v1547 = vpack.c.bf16 %v1448, %v1445
          %v1548 = vpack.c.bf16 %v1456, %v1453
          %v1549 = vpack.c.bf16 %v1464, %v1461
          %v1550 = vpack.c.bf16 %v1472, %v1469
          %v1551 = vpack.c.bf16 %v1480, %v1477
          %v1552 = vpack.c.bf16 %v1488, %v1485
          %v1553 = vpack.c.bf16 %v1496, %v1493
          %v1554 = vpack.c.bf16 %v1504, %v1501
          %v1587 = vunpack.c.l.b16 %v408
          %v1588 = vunpack.c.h.b16 %v408
          %v1589 = vunpack.c.l.b16 %v409
          %v1590 = vunpack.c.h.b16 %v409
          %v1591 = vunpack.c.l.b16 %v410
          %v1592 = vunpack.c.h.b16 %v410
          %v1593 = vunpack.c.l.b16 %v411
          %v1594 = vunpack.c.h.b16 %v411
          %v1595 = vunpack.c.l.b16 %v412
          %v1596 = vunpack.c.h.b16 %v412
          %v1597 = vunpack.c.l.b16 %v413
          %v1598 = vunpack.c.h.b16 %v413
          %v1599 = vunpack.c.l.b16 %v414
          %v1600 = vunpack.c.h.b16 %v414
          %v1601 = vunpack.c.l.b16 %v415
          %v1602 = vunpack.c.h.b16 %v415
          %v1603 = vunpack.c.l.b16 %v416
          %v1604 = vunpack.c.h.b16 %v416
          %v1605 = vunpack.c.l.b16 %v417
          %v1606 = vunpack.c.h.b16 %v417
          %v1607 = vunpack.c.l.b16 %v418
          %v1608 = vunpack.c.h.b16 %v418
          %v1609 = vunpack.c.l.b16 %v419
          %v1610 = vunpack.c.h.b16 %v419
          %v1611 = vunpack.c.l.b16 %v420
          %v1612 = vunpack.c.h.b16 %v420
          %v1613 = vunpack.c.l.b16 %v421
          %v1614 = vunpack.c.h.b16 %v421
          %v1615 = vunpack.c.l.b16 %v422
          %v1616 = vunpack.c.h.b16 %v422
          %v1617 = vunpack.c.l.b16 %v423
          %v1618 = vunpack.c.h.b16 %v423
          %v1619 = vunpack.c.l.b16 %v424
          %v1620 = vunpack.c.h.b16 %v424
          %v1621 = vunpack.c.l.b16 %v425
          %v1622 = vunpack.c.h.b16 %v425
          %v1623 = vunpack.c.l.b16 %v426
          %v1624 = vunpack.c.h.b16 %v426
          %v1625 = vunpack.c.l.b16 %v427
          %v1626 = vunpack.c.h.b16 %v427
          %v1627 = vunpack.c.l.b16 %v428
          %v1628 = vunpack.c.h.b16 %v428
          %v1629 = vunpack.c.l.b16 %v429
          %v1630 = vunpack.c.h.b16 %v429
          %v1631 = vunpack.c.l.b16 %v430
          %v1632 = vunpack.c.h.b16 %v430
          %v1633 = vunpack.c.l.b16 %v431
          %v1634 = vunpack.c.h.b16 %v431
          %v1635 = vunpack.c.l.b16 %v432
          %v1636 = vunpack.c.h.b16 %v432
          %v1637 = vunpack.c.l.b16 %v433
          %v1638 = vunpack.c.h.b16 %v433
          %v1639 = vunpack.c.l.b16 %v434
          %v1640 = vunpack.c.h.b16 %v434
          %v1641 = vunpack.c.l.b16 %v435
          %v1642 = vunpack.c.h.b16 %v435
          %v1643 = vunpack.c.l.b16 %v436
          %v1644 = vunpack.c.h.b16 %v436
          %v1645 = vunpack.c.l.b16 %v437
          %v1646 = vunpack.c.h.b16 %v437
          %v1647 = vunpack.c.l.b16 %v438
          %v1648 = vunpack.c.h.b16 %v438
          %v1649 = vunpack.c.l.b16 %v439
          %v1650 = vunpack.c.h.b16 %v439
          %v1651 = vpack.c.b16 %v1589, %v1587
          %v1652 = vpack.c.b16 %v1590, %v1588
          %v1653 = vpack.c.b16 %v1593, %v1591
          %v1654 = vpack.c.b16 %v1594, %v1592
          %v1655 = vpack.c.b16 %v1597, %v1595
          %v1656 = vpack.c.b16 %v1598, %v1596
          %v1657 = vpack.c.b16 %v1601, %v1599
          %v1658 = vpack.c.b16 %v1602, %v1600
          %v1659 = vpack.c.b16 %v1605, %v1603
          %v1660 = vpack.c.b16 %v1606, %v1604
          %v1661 = vpack.c.b16 %v1609, %v1607
          %v1662 = vpack.c.b16 %v1610, %v1608
          %v1663 = vpack.c.b16 %v1613, %v1611
          %v1664 = vpack.c.b16 %v1614, %v1612
          %v1665 = vpack.c.b16 %v1617, %v1615
          %v1666 = vpack.c.b16 %v1618, %v1616
          %v1667 = vpack.c.b16 %v1621, %v1619
          %v1668 = vpack.c.b16 %v1622, %v1620
          %v1669 = vpack.c.b16 %v1625, %v1623
          %v1670 = vpack.c.b16 %v1626, %v1624
          %v1671 = vpack.c.b16 %v1629, %v1627
          %v1672 = vpack.c.b16 %v1630, %v1628
          %v1673 = vpack.c.b16 %v1633, %v1631
          %v1674 = vpack.c.b16 %v1634, %v1632
          %v1675 = vpack.c.b16 %v1637, %v1635
          %v1676 = vpack.c.b16 %v1638, %v1636
          %v1677 = vpack.c.b16 %v1641, %v1639
          %v1678 = vpack.c.b16 %v1642, %v1640
          %v1679 = vpack.c.b16 %v1645, %v1643
          %v1680 = vpack.c.b16 %v1646, %v1644
          %v1681 = vpack.c.b16 %v1649, %v1647
          %v1682 = vpack.c.b16 %v1650, %v1648
          %1715 = vmatprep.subr.bf16.mxu0 0
          %1716 = vmatpush1.bf16.msra.mxu0 %v1539
          %1717 = vmatprep.subr.bf16.mxu0 0
          %1718 = vmatpush1.bf16.msra.mxu0 %v1540
          %1719 = vmatprep.subr.bf16.mxu0 0
          %1720 = vmatpush1.bf16.msra.mxu0 %v1541
          %1721 = vmatprep.subr.bf16.mxu0 0
          %1722 = vmatpush1.bf16.msra.mxu0 %v1542
          %1723 = vmatprep.subr.bf16.mxu0 0
          %1724 = vmatpush1.bf16.msra.mxu0 %v1543
          %1725 = vmatprep.subr.bf16.mxu0 0
          %1726 = vmatpush1.bf16.msra.mxu0 %v1544
          %1727 = vmatprep.subr.bf16.mxu0 0
          %1728 = vmatpush1.bf16.msra.mxu0 %v1545
          %1729 = vmatprep.subr.bf16.mxu0 0
          %1730 = vmatpush1.bf16.msra.mxu0 %v1546
          %1731 = vmatprep.subr.bf16.mxu0 0
          %1732 = vmatpush1.bf16.msra.mxu0 %v1547
          %1733 = vmatprep.subr.bf16.mxu0 0
          %1734 = vmatpush1.bf16.msra.mxu0 %v1548
          %1735 = vmatprep.subr.bf16.mxu0 0
          %1736 = vmatpush1.bf16.msra.mxu0 %v1549
          %1737 = vmatprep.subr.bf16.mxu0 0
          %1738 = vmatpush1.bf16.msra.mxu0 %v1550
          %1739 = vmatprep.subr.bf16.mxu0 0
          %1740 = vmatpush1.bf16.msra.mxu0 %v1551
          %1741 = vmatprep.subr.bf16.mxu0 0
          %1742 = vmatpush1.bf16.msra.mxu0 %v1552
          %1743 = vmatprep.subr.bf16.mxu0 0
          %1744 = vmatpush1.bf16.msra.mxu0 %v1553
          %1745 = vmatprep.subr.bf16.mxu0 0
          %1746 = vmatpush1.bf16.msra.mxu0 %v1554
          %1747 = vmatprep.mubr.bf16.mxu0 %v1652
          %1748 = vmatmul.mubr.bf16.gmra.mrb[0].mxu0 %v1651
          %v1749 = vpop.f32.mrb[0].mxu0
          %v1750 = vadd.f32 0.0, %v1749
          %v1751 = vpop.f32.mrb[0].mxu0
          %v1752 = vpop.f32.mrb[0].mxu0
          %v1753 = vadd.f32 0.0, %v1752
          %v1754 = vpop.f32.mrb[0].mxu0
          %1755 = vmatprep.mubr.bf16.mxu0 %v1654
          %1756 = vmatmul.mubr.bf16.gmra.mrb[0].mxu0 %v1653
          %v1757 = vpop.f32.mrb[0].mxu0
          %v1758 = vadd.f32 0.0, %v1757
          %v1759 = vpop.f32.mrb[0].mxu0
          %v1760 = vpop.f32.mrb[0].mxu0
          %v1761 = vadd.f32 0.0, %v1760
          %v1762 = vpop.f32.mrb[0].mxu0
          %1763 = vmatprep.mubr.bf16.mxu0 %v1656
          %1764 = vmatmul.mubr.bf16.gmra.mrb[0].mxu0 %v1655
          %v1765 = vpop.f32.mrb[0].mxu0
          %v1766 = vadd.f32 0.0, %v1765
          %v1767 = vpop.f32.mrb[0].mxu0
          %v1768 = vpop.f32.mrb[0].mxu0
          %v1769 = vadd.f32 0.0, %v1768
          %v1770 = vpop.f32.mrb[0].mxu0
          %1771 = vmatprep.mubr.bf16.mxu0 %v1658
          %1772 = vmatmul.mubr.bf16.gmra.mrb[0].mxu0 %v1657
          %v1773 = vpop.f32.mrb[0].mxu0
          %v1774 = vadd.f32 0.0, %v1773
          %v1775 = vpop.f32.mrb[0].mxu0
          %v1776 = vpop.f32.mrb[0].mxu0
          %v1777 = vadd.f32 0.0, %v1776
          %v1778 = vpop.f32.mrb[0].mxu0
          %1779 = vmatprep.mubr.bf16.mxu0 %v1660
          %1780 = vmatmul.mubr.bf16.gmra.mrb[0].mxu0 %v1659
          %v1781 = vpop.f32.mrb[0].mxu0
          %v1782 = vadd.f32 0.0, %v1781
          %v1783 = vpop.f32.mrb[0].mxu0
          %v1784 = vpop.f32.mrb[0].mxu0
          %v1785 = vadd.f32 0.0, %v1784
          %v1786 = vpop.f32.mrb[0].mxu0
          %1787 = vmatprep.mubr.bf16.mxu0 %v1662
          %1788 = vmatmul.mubr.bf16.gmra.mrb[0].mxu0 %v1661
          %v1789 = vpop.f32.mrb[0].mxu0
          %v1790 = vadd.f32 0.0, %v1789
          %v1791 = vpop.f32.mrb[0].mxu0
          %v1792 = vpop.f32.mrb[0].mxu0
          %v1793 = vadd.f32 0.0, %v1792
          %v1794 = vpop.f32.mrb[0].mxu0
          %1795 = vmatprep.mubr.bf16.mxu0 %v1664
          %1796 = vmatmul.mubr.bf16.gmra.mrb[0].mxu0 %v1663
          %v1797 = vpop.f32.mrb[0].mxu0
          %v1798 = vadd.f32 0.0, %v1797
          %v1799 = vpop.f32.mrb[0].mxu0
          %v1800 = vpop.f32.mrb[0].mxu0
          %v1801 = vadd.f32 0.0, %v1800
          %v1802 = vpop.f32.mrb[0].mxu0
          %1803 = vmatprep.mubr.bf16.mxu0 %v1666
          %1804 = vmatmul.mubr.bf16.gmra.mrb[0].mxu0 %v1665
          %v1805 = vpop.f32.mrb[0].mxu0
          %v1806 = vadd.f32 0.0, %v1805
          %v1807 = vpop.f32.mrb[0].mxu0
          %v1808 = vpop.f32.mrb[0].mxu0
          %v1809 = vadd.f32 0.0, %v1808
          %v1810 = vpop.f32.mrb[0].mxu0
          %1811 = vmatprep.mubr.bf16.mxu0 %v1668
          %1812 = vmatmul.mubr.bf16.gmra.mrb[0].mxu0 %v1667
          %v1813 = vpop.f32.mrb[0].mxu0
          %v1814 = vadd.f32 0.0, %v1813
          %v1815 = vpop.f32.mrb[0].mxu0
          %v1816 = vpop.f32.mrb[0].mxu0
          %v1817 = vadd.f32 0.0, %v1816
          %v1818 = vpop.f32.mrb[0].mxu0
          %1819 = vmatprep.mubr.bf16.mxu0 %v1670
          %1820 = vmatmul.mubr.bf16.gmra.mrb[0].mxu0 %v1669
          %v1821 = vpop.f32.mrb[0].mxu0
          %v1822 = vadd.f32 0.0, %v1821
          %v1823 = vpop.f32.mrb[0].mxu0
          %v1824 = vpop.f32.mrb[0].mxu0
          %v1825 = vadd.f32 0.0, %v1824
          %v1826 = vpop.f32.mrb[0].mxu0
          %1827 = vmatprep.mubr.bf16.mxu0 %v1672
          %1828 = vmatmul.mubr.bf16.gmra.mrb[0].mxu0 %v1671
          %v1829 = vpop.f32.mrb[0].mxu0
          %v1830 = vadd.f32 0.0, %v1829
          %v1831 = vpop.f32.mrb[0].mxu0
          %v1832 = vpop.f32.mrb[0].mxu0
          %v1833 = vadd.f32 0.0, %v1832
          %v1834 = vpop.f32.mrb[0].mxu0
          %1835 = vmatprep.mubr.bf16.mxu0 %v1674
          %1836 = vmatmul.mubr.bf16.gmra.mrb[0].mxu0 %v1673
          %v1837 = vpop.f32.mrb[0].mxu0
          %v1838 = vadd.f32 0.0, %v1837
          %v1839 = vpop.f32.mrb[0].mxu0
          %v1840 = vpop.f32.mrb[0].mxu0
          %v1841 = vadd.f32 0.0, %v1840
          %v1842 = vpop.f32.mrb[0].mxu0
          %1843 = vmatprep.mubr.bf16.mxu0 %v1676
          %1844 = vmatmul.mubr.bf16.gmra.mrb[0].mxu0 %v1675
          %v1845 = vpop.f32.mrb[0].mxu0
          %v1846 = vadd.f32 0.0, %v1845
          %v1847 = vpop.f32.mrb[0].mxu0
          %v1848 = vpop.f32.mrb[0].mxu0
          %v1849 = vadd.f32 0.0, %v1848
          %v1850 = vpop.f32.mrb[0].mxu0
          %1851 = vmatprep.mubr.bf16.mxu0 %v1678
          %1852 = vmatmul.mubr.bf16.gmra.mrb[0].mxu0 %v1677
          %v1853 = vpop.f32.mrb[0].mxu0
          %v1854 = vadd.f32 0.0, %v1853
          %v1855 = vpop.f32.mrb[0].mxu0
          %v1856 = vpop.f32.mrb[0].mxu0
          %v1857 = vadd.f32 0.0, %v1856
          %v1858 = vpop.f32.mrb[0].mxu0
          %1859 = vmatprep.mubr.bf16.mxu0 %v1680
          %1860 = vmatmul.mubr.bf16.gmra.mrb[0].mxu0 %v1679
          %v1861 = vpop.f32.mrb[0].mxu0
          %v1862 = vadd.f32 0.0, %v1861
          %v1863 = vpop.f32.mrb[0].mxu0
          %v1864 = vpop.f32.mrb[0].mxu0
          %v1865 = vadd.f32 0.0, %v1864
          %v1866 = vpop.f32.mrb[0].mxu0
          %1867 = vmatprep.mubr.bf16.mxu0 %v1682
          %1868 = vmatmul.mubr.bf16.gmra.mrb[0].mxu0 %v1681
          %v1869 = vpop.f32.mrb[0].mxu0
          %v1870 = vadd.f32 0.0, %v1869
          %v1871 = vpop.f32.mrb[0].mxu0
          %v1872 = vpop.f32.mrb[0].mxu0
          %v1873 = vadd.f32 0.0, %v1872
          %v1874 = vpop.f32.mrb[0].mxu0
          %1875 = vdwg.mxu0
          %v1876 = vadd.f32 %v1507, %v1750
          %v1877 = vadd.f32 %v1508, %v1753
          %v1878 = vadd.f32 %v1509, %v1758
          %v1879 = vadd.f32 %v1510, %v1761
          %v1880 = vadd.f32 %v1511, %v1766
          %v1881 = vadd.f32 %v1512, %v1769
          %v1882 = vadd.f32 %v1513, %v1774
          %v1883 = vadd.f32 %v1514, %v1777
          %v1884 = vadd.f32 %v1515, %v1782
          %v1885 = vadd.f32 %v1516, %v1785
          %v1886 = vadd.f32 %v1517, %v1790
          %v1887 = vadd.f32 %v1518, %v1793
          %v1888 = vadd.f32 %v1519, %v1798
          %v1889 = vadd.f32 %v1520, %v1801
          %v1890 = vadd.f32 %v1521, %v1806
          %v1891 = vadd.f32 %v1522, %v1809
          %v1892 = vadd.f32 %v1523, %v1814
          %v1893 = vadd.f32 %v1524, %v1817
          %v1894 = vadd.f32 %v1525, %v1822
          %v1895 = vadd.f32 %v1526, %v1825
          %v1896 = vadd.f32 %v1527, %v1830
          %v1897 = vadd.f32 %v1528, %v1833
          %v1898 = vadd.f32 %v1529, %v1838
          %v1899 = vadd.f32 %v1530, %v1841
          %v1900 = vadd.f32 %v1531, %v1846
          %v1901 = vadd.f32 %v1532, %v1849
          %v1902 = vadd.f32 %v1533, %v1854
          %v1903 = vadd.f32 %v1534, %v1857
          %v1904 = vadd.f32 %v1535, %v1862
          %v1905 = vadd.f32 %v1536, %v1865
          %v1906 = vadd.f32 %v1537, %v1870
          %v1907 = vadd.f32 %v1538, %v1873
          %1908 = vst [vmem:[#allocation11] sm:$0xff] %v1876
          %1909 = vst [vmem:[#allocation11 + $0x8] sm:$0xff] %v1877
          %1910 = vst [vmem:[#allocation11 + $0x10] sm:$0xff] %v1878
          %1911 = vst [vmem:[#allocation11 + $0x18] sm:$0xff] %v1879
          %1912 = vst [vmem:[#allocation11 + $0x20] sm:$0xff] %v1880
          %1913 = vst [vmem:[#allocation11 + $0x28] sm:$0xff] %v1881
          %1914 = vst [vmem:[#allocation11 + $0x30] sm:$0xff] %v1882
          %1915 = vst [vmem:[#allocation11 + $0x38] sm:$0xff] %v1883
          %1916 = vst [vmem:[#allocation11 + $0x40] sm:$0xff] %v1884
          %1917 = vst [vmem:[#allocation11 + $0x48] sm:$0xff] %v1885
          %1918 = vst [vmem:[#allocation11 + $0x50] sm:$0xff] %v1886
          %1919 = vst [vmem:[#allocation11 + $0x58] sm:$0xff] %v1887
          %1920 = vst [vmem:[#allocation11 + $0x60] sm:$0xff] %v1888
          %1921 = vst [vmem:[#allocation11 + $0x68] sm:$0xff] %v1889
          %1922 = vst [vmem:[#allocation11 + $0x70] sm:$0xff] %v1890
          %1923 = vst [vmem:[#allocation11 + $0x78] sm:$0xff] %v1891
          %1924 = vst [vmem:[#allocation11 + $0x80] sm:$0xff] %v1892
          %1925 = vst [vmem:[#allocation11 + $0x88] sm:$0xff] %v1893
          %1926 = vst [vmem:[#allocation11 + $0x90] sm:$0xff] %v1894
          %1927 = vst [vmem:[#allocation11 + $0x98] sm:$0xff] %v1895
          %1928 = vst [vmem:[#allocation11 + $0xa0] sm:$0xff] %v1896
          %1929 = vst [vmem:[#allocation11 + $0xa8] sm:$0xff] %v1897
          %1930 = vst [vmem:[#allocation11 + $0xb0] sm:$0xff] %v1898
          %1931 = vst [vmem:[#allocation11 + $0xb8] sm:$0xff] %v1899
          %1932 = vst [vmem:[#allocation11 + $0xc0] sm:$0xff] %v1900
          %1933 = vst [vmem:[#allocation11 + $0xc8] sm:$0xff] %v1901
          %1934 = vst [vmem:[#allocation11 + $0xd0] sm:$0xff] %v1902
          %1935 = vst [vmem:[#allocation11 + $0xd8] sm:$0xff] %v1903
          %1936 = vst [vmem:[#allocation11 + $0xe0] sm:$0xff] %v1904
          %1937 = vst [vmem:[#allocation11 + $0xe8] sm:$0xff] %v1905
          %1938 = vst [vmem:[#allocation11 + $0xf0] sm:$0xff] %v1906
          %1939 = vst [vmem:[#allocation11 + $0xf8] sm:$0xff] %v1907
        $region76: #{tpu_custom_call.1} parent=43 // pred_fallthru
          _
        // Predicated region
        $region77: #{tpu_custom_call.1} parent=43 // pred_check
          _
        $region78: #{tpu_custom_call.1} parent=43 // pred_check_branch
          %1941 = sbr.rel (%p335) target = $region80
        $region79: #{tpu_custom_call.1} parent=43 // pred_region
          %v1942 = vld [vmem:[#allocation2] sm:$0xff]
          %v1943 = vld [vmem:[#allocation2 + $0x8] sm:$0xff]
          %v1944 = vld [vmem:[#allocation2 + $0x10] sm:$0xff]
          %v1945 = vld [vmem:[#allocation2 + $0x18] sm:$0xff]
          %v1946 = vld [vmem:[#allocation2 + $0x20] sm:$0xff]
          %v1947 = vld [vmem:[#allocation2 + $0x28] sm:$0xff]
          %v1948 = vld [vmem:[#allocation2 + $0x30] sm:$0xff]
          %v1949 = vld [vmem:[#allocation2 + $0x38] sm:$0xff]
          %v1950 = vld [vmem:[#allocation2 + $0x40] sm:$0xff]
          %v1951 = vld [vmem:[#allocation2 + $0x48] sm:$0xff]
          %v1952 = vld [vmem:[#allocation2 + $0x50] sm:$0xff]
          %v1953 = vld [vmem:[#allocation2 + $0x58] sm:$0xff]
          %v1954 = vld [vmem:[#allocation2 + $0x60] sm:$0xff]
          %v1955 = vld [vmem:[#allocation2 + $0x68] sm:$0xff]
          %v1956 = vld [vmem:[#allocation2 + $0x70] sm:$0xff]
          %v1957 = vld [vmem:[#allocation2 + $0x78] sm:$0xff]
          %v1958 = vld [vmem:[#allocation2 + $0x80] sm:$0xff]
          %v1959 = vld [vmem:[#allocation2 + $0x88] sm:$0xff]
          %v1960 = vld [vmem:[#allocation2 + $0x90] sm:$0xff]
          %v1961 = vld [vmem:[#allocation2 + $0x98] sm:$0xff]
          %v1962 = vld [vmem:[#allocation2 + $0xa0] sm:$0xff]
          %v1963 = vld [vmem:[#allocation2 + $0xa8] sm:$0xff]
          %v1964 = vld [vmem:[#allocation2 + $0xb0] sm:$0xff]
          %v1965 = vld [vmem:[#allocation2 + $0xb8] sm:$0xff]
          %v1966 = vld [vmem:[#allocation2 + $0xc0] sm:$0xff]
          %v1967 = vld [vmem:[#allocation2 + $0xc8] sm:$0xff]
          %v1968 = vld [vmem:[#allocation2 + $0xd0] sm:$0xff]
          %v1969 = vld [vmem:[#allocation2 + $0xd8] sm:$0xff]
          %v1970 = vld [vmem:[#allocation2 + $0xe0] sm:$0xff]
          %v1971 = vld [vmem:[#allocation2 + $0xe8] sm:$0xff]
          %v1972 = vld [vmem:[#allocation2 + $0xf0] sm:$0xff]
          %v1973 = vld [vmem:[#allocation2 + $0xf8] sm:$0xff]
          %v1974 = vld [vmem:[%s3] sm:$0x1]
          %v1976 = vlaneseq
          %v1977 = vshrl.u32 %v1976, 7
          %v1978 = vsub.s32 0, %v1977
          %v1979 = vrot.slane %v1974, %v1978
          %v1981 = vadd.f32 %v1942, %v1979
          %v1982 = vadd.f32 %v1943, %v1979
          %v1983 = vadd.f32 %v1944, %v1979
          %v1984 = vadd.f32 %v1945, %v1979
          %v1985 = vadd.f32 %v1946, %v1979
          %v1986 = vadd.f32 %v1947, %v1979
          %v1987 = vadd.f32 %v1948, %v1979
          %v1988 = vadd.f32 %v1949, %v1979
          %v1989 = vadd.f32 %v1950, %v1979
          %v1990 = vadd.f32 %v1951, %v1979
          %v1991 = vadd.f32 %v1952, %v1979
          %v1992 = vadd.f32 %v1953, %v1979
          %v1993 = vadd.f32 %v1954, %v1979
          %v1994 = vadd.f32 %v1955, %v1979
          %v1995 = vadd.f32 %v1956, %v1979
          %v1996 = vadd.f32 %v1957, %v1979
          %v1997 = vadd.f32 %v1958, %v1979
          %v1998 = vadd.f32 %v1959, %v1979
          %v1999 = vadd.f32 %v1960, %v1979
          %v2000 = vadd.f32 %v1961, %v1979
          %v2001 = vadd.f32 %v1962, %v1979
          %v2002 = vadd.f32 %v1963, %v1979
          %v2003 = vadd.f32 %v1964, %v1979
          %v2004 = vadd.f32 %v1965, %v1979
          %v2005 = vadd.f32 %v1966, %v1979
          %v2006 = vadd.f32 %v1967, %v1979
          %v2007 = vadd.f32 %v1968, %v1979
          %v2008 = vadd.f32 %v1969, %v1979
          %v2009 = vadd.f32 %v1970, %v1979
          %v2010 = vadd.f32 %v1971, %v1979
          %v2011 = vadd.f32 %v1972, %v1979
          %v2012 = vadd.f32 %v1973, %v1979
          %v2013 = vmax.f32 %v1981, 0.0
          %v2014 = vmax.f32 %v1982, 0.0
          %v2015 = vmax.f32 %v1983, 0.0
          %v2016 = vmax.f32 %v1984, 0.0
          %v2017 = vmax.f32 %v1985, 0.0
          %v2018 = vmax.f32 %v1986, 0.0
          %v2019 = vmax.f32 %v1987, 0.0
          %v2020 = vmax.f32 %v1988, 0.0
          %v2021 = vmax.f32 %v1989, 0.0
          %v2022 = vmax.f32 %v1990, 0.0
          %v2023 = vmax.f32 %v1991, 0.0
          %v2024 = vmax.f32 %v1992, 0.0
          %v2025 = vmax.f32 %v1993, 0.0
          %v2026 = vmax.f32 %v1994, 0.0
          %v2027 = vmax.f32 %v1995, 0.0
          %v2028 = vmax.f32 %v1996, 0.0
          %v2029 = vmax.f32 %v1997, 0.0
          %v2030 = vmax.f32 %v1998, 0.0
          %v2031 = vmax.f32 %v1999, 0.0
          %v2032 = vmax.f32 %v2000, 0.0
          %v2033 = vmax.f32 %v2001, 0.0
          %v2034 = vmax.f32 %v2002, 0.0
          %v2035 = vmax.f32 %v2003, 0.0
          %v2036 = vmax.f32 %v2004, 0.0
          %v2037 = vmax.f32 %v2005, 0.0
          %v2038 = vmax.f32 %v2006, 0.0
          %v2039 = vmax.f32 %v2007, 0.0
          %v2040 = vmax.f32 %v2008, 0.0
          %v2041 = vmax.f32 %v2009, 0.0
          %v2042 = vmax.f32 %v2010, 0.0
          %v2043 = vmax.f32 %v2011, 0.0
          %v2044 = vmax.f32 %v2012, 0.0
          %2045 = vst [vmem:[#allocation2] sm:$0xff] %v2013
          %2046 = vst [vmem:[#allocation2 + $0x8] sm:$0xff] %v2014
          %2047 = vst [vmem:[#allocation2 + $0x10] sm:$0xff] %v2015
          %2048 = vst [vmem:[#allocation2 + $0x18] sm:$0xff] %v2016
          %2049 = vst [vmem:[#allocation2 + $0x20] sm:$0xff] %v2017
          %2050 = vst [vmem:[#allocation2 + $0x28] sm:$0xff] %v2018
          %2051 = vst [vmem:[#allocation2 + $0x30] sm:$0xff] %v2019
          %2052 = vst [vmem:[#allocation2 + $0x38] sm:$0xff] %v2020
          %2053 = vst [vmem:[#allocation2 + $0x40] sm:$0xff] %v2021
          %2054 = vst [vmem:[#allocation2 + $0x48] sm:$0xff] %v2022
          %2055 = vst [vmem:[#allocation2 + $0x50] sm:$0xff] %v2023
          %2056 = vst [vmem:[#allocation2 + $0x58] sm:$0xff] %v2024
          %2057 = vst [vmem:[#allocation2 + $0x60] sm:$0xff] %v2025
          %2058 = vst [vmem:[#allocation2 + $0x68] sm:$0xff] %v2026
          %2059 = vst [vmem:[#allocation2 + $0x70] sm:$0xff] %v2027
          %2060 = vst [vmem:[#allocation2 + $0x78] sm:$0xff] %v2028
          %2061 = vst [vmem:[#allocation2 + $0x80] sm:$0xff] %v2029
          %2062 = vst [vmem:[#allocation2 + $0x88] sm:$0xff] %v2030
          %2063 = vst [vmem:[#allocation2 + $0x90] sm:$0xff] %v2031
          %2064 = vst [vmem:[#allocation2 + $0x98] sm:$0xff] %v2032
          %2065 = vst [vmem:[#allocation2 + $0xa0] sm:$0xff] %v2033
          %2066 = vst [vmem:[#allocation2 + $0xa8] sm:$0xff] %v2034
          %2067 = vst [vmem:[#allocation2 + $0xb0] sm:$0xff] %v2035
          %2068 = vst [vmem:[#allocation2 + $0xb8] sm:$0xff] %v2036
          %2069 = vst [vmem:[#allocation2 + $0xc0] sm:$0xff] %v2037
          %2070 = vst [vmem:[#allocation2 + $0xc8] sm:$0xff] %v2038
          %2071 = vst [vmem:[#allocation2 + $0xd0] sm:$0xff] %v2039
          %2072 = vst [vmem:[#allocation2 + $0xd8] sm:$0xff] %v2040
          %2073 = vst [vmem:[#allocation2 + $0xe0] sm:$0xff] %v2041
          %2074 = vst [vmem:[#allocation2 + $0xe8] sm:$0xff] %v2042
          %2075 = vst [vmem:[#allocation2 + $0xf0] sm:$0xff] %v2043
          %2076 = vst [vmem:[#allocation2 + $0xf8] sm:$0xff] %v2044
        $region80: #{tpu_custom_call.1} parent=43 // pred_fallthru
          _
        // Predicated region
        $region81: #{tpu_custom_call.1} parent=43 // pred_check
          _
        $region82: #{tpu_custom_call.1} parent=43 // pred_check_branch
          %2078 = sbr.rel (%p372) target = $region84
        $region83: #{tpu_custom_call.1} parent=43 // pred_region
          %v2079 = vld [vmem:[#allocation11] sm:$0xff]
          %v2080 = vld [vmem:[#allocation11 + $0x8] sm:$0xff]
          %v2081 = vld [vmem:[#allocation11 + $0x10] sm:$0xff]
          %v2082 = vld [vmem:[#allocation11 + $0x18] sm:$0xff]
          %v2083 = vld [vmem:[#allocation11 + $0x20] sm:$0xff]
          %v2084 = vld [vmem:[#allocation11 + $0x28] sm:$0xff]
          %v2085 = vld [vmem:[#allocation11 + $0x30] sm:$0xff]
          %v2086 = vld [vmem:[#allocation11 + $0x38] sm:$0xff]
          %v2087 = vld [vmem:[#allocation11 + $0x40] sm:$0xff]
          %v2088 = vld [vmem:[#allocation11 + $0x48] sm:$0xff]
          %v2089 = vld [vmem:[#allocation11 + $0x50] sm:$0xff]
          %v2090 = vld [vmem:[#allocation11 + $0x58] sm:$0xff]
          %v2091 = vld [vmem:[#allocation11 + $0x60] sm:$0xff]
          %v2092 = vld [vmem:[#allocation11 + $0x68] sm:$0xff]
          %v2093 = vld [vmem:[#allocation11 + $0x70] sm:$0xff]
          %v2094 = vld [vmem:[#allocation11 + $0x78] sm:$0xff]
          %v2095 = vld [vmem:[#allocation11 + $0x80] sm:$0xff]
          %v2096 = vld [vmem:[#allocation11 + $0x88] sm:$0xff]
          %v2097 = vld [vmem:[#allocation11 + $0x90] sm:$0xff]
          %v2098 = vld [vmem:[#allocation11 + $0x98] sm:$0xff]
          %v2099 = vld [vmem:[#allocation11 + $0xa0] sm:$0xff]
          %v2100 = vld [vmem:[#allocation11 + $0xa8] sm:$0xff]
          %v2101 = vld [vmem:[#allocation11 + $0xb0] sm:$0xff]
          %v2102 = vld [vmem:[#allocation11 + $0xb8] sm:$0xff]
          %v2103 = vld [vmem:[#allocation11 + $0xc0] sm:$0xff]
          %v2104 = vld [vmem:[#allocation11 + $0xc8] sm:$0xff]
          %v2105 = vld [vmem:[#allocation11 + $0xd0] sm:$0xff]
          %v2106 = vld [vmem:[#allocation11 + $0xd8] sm:$0xff]
          %v2107 = vld [vmem:[#allocation11 + $0xe0] sm:$0xff]
          %v2108 = vld [vmem:[#allocation11 + $0xe8] sm:$0xff]
          %v2109 = vld [vmem:[#allocation11 + $0xf0] sm:$0xff]
          %v2110 = vld [vmem:[#allocation11 + $0xf8] sm:$0xff]
          %v2111 = vld [vmem:[%s5] sm:$0x1]
          %v2113 = vlaneseq
          %v2114 = vshrl.u32 %v2113, 7
          %v2115 = vsub.s32 0, %v2114
          %v2116 = vrot.slane %v2111, %v2115
          %v2118 = vadd.f32 %v2079, %v2116
          %v2119 = vadd.f32 %v2080, %v2116
          %v2120 = vadd.f32 %v2081, %v2116
          %v2121 = vadd.f32 %v2082, %v2116
          %v2122 = vadd.f32 %v2083, %v2116
          %v2123 = vadd.f32 %v2084, %v2116
          %v2124 = vadd.f32 %v2085, %v2116
          %v2125 = vadd.f32 %v2086, %v2116
          %v2126 = vadd.f32 %v2087, %v2116
          %v2127 = vadd.f32 %v2088, %v2116
          %v2128 = vadd.f32 %v2089, %v2116
          %v2129 = vadd.f32 %v2090, %v2116
          %v2130 = vadd.f32 %v2091, %v2116
          %v2131 = vadd.f32 %v2092, %v2116
          %v2132 = vadd.f32 %v2093, %v2116
          %v2133 = vadd.f32 %v2094, %v2116
          %v2134 = vadd.f32 %v2095, %v2116
          %v2135 = vadd.f32 %v2096, %v2116
          %v2136 = vadd.f32 %v2097, %v2116
          %v2137 = vadd.f32 %v2098, %v2116
          %v2138 = vadd.f32 %v2099, %v2116
          %v2139 = vadd.f32 %v2100, %v2116
          %v2140 = vadd.f32 %v2101, %v2116
          %v2141 = vadd.f32 %v2102, %v2116
          %v2142 = vadd.f32 %v2103, %v2116
          %v2143 = vadd.f32 %v2104, %v2116
          %v2144 = vadd.f32 %v2105, %v2116
          %v2145 = vadd.f32 %v2106, %v2116
          %v2146 = vadd.f32 %v2107, %v2116
          %v2147 = vadd.f32 %v2108, %v2116
          %v2148 = vadd.f32 %v2109, %v2116
          %v2149 = vadd.f32 %v2110, %v2116
          %v2150 = vlaneseq
          %v2151 = vand.u32 %v2150, 127
          %vm2152 = vcmp.lt.s32.totalorder %v2151, 8
          %v2153 = vsel %vm2152, %v2118, -1e+30
          %v2154 = vsel %vm2152, %v2119, -1e+30
          %v2155 = vsel %vm2152, %v2120, -1e+30
          %v2156 = vsel %vm2152, %v2121, -1e+30
          %v2157 = vsel %vm2152, %v2122, -1e+30
          %v2158 = vsel %vm2152, %v2123, -1e+30
          %v2159 = vsel %vm2152, %v2124, -1e+30
          %v2160 = vsel %vm2152, %v2125, -1e+30
          %v2161 = vsel %vm2152, %v2126, -1e+30
          %v2162 = vsel %vm2152, %v2127, -1e+30
          %v2163 = vsel %vm2152, %v2128, -1e+30
          %v2164 = vsel %vm2152, %v2129, -1e+30
          %v2165 = vsel %vm2152, %v2130, -1e+30
          %v2166 = vsel %vm2152, %v2131, -1e+30
          %v2167 = vsel %vm2152, %v2132, -1e+30
          %v2168 = vsel %vm2152, %v2133, -1e+30
          %v2169 = vsel %vm2152, %v2134, -1e+30
          %v2170 = vsel %vm2152, %v2135, -1e+30
          %v2171 = vsel %vm2152, %v2136, -1e+30
          %v2172 = vsel %vm2152, %v2137, -1e+30
          %v2173 = vsel %vm2152, %v2138, -1e+30
          %v2174 = vsel %vm2152, %v2139, -1e+30
          %v2175 = vsel %vm2152, %v2140, -1e+30
          %v2176 = vsel %vm2152, %v2141, -1e+30
          %v2177 = vsel %vm2152, %v2142, -1e+30
          %v2178 = vsel %vm2152, %v2143, -1e+30
          %v2179 = vsel %vm2152, %v2144, -1e+30
          %v2180 = vsel %vm2152, %v2145, -1e+30
          %v2181 = vsel %vm2152, %v2146, -1e+30
          %v2182 = vsel %vm2152, %v2147, -1e+30
          %v2183 = vsel %vm2152, %v2148, -1e+30
          %v2184 = vsel %vm2152, %v2149, -1e+30
          %2185 = vmax.xlane.f32.xlu0 %v2153
          %v2186 = vpop.xlane.xlu0 %2185
          %2187 = vmax.xlane.f32.xlu0 %v2154
          %v2188 = vpop.xlane.xlu0 %2187
          %2189 = vmax.xlane.f32.xlu0 %v2155
          %v2190 = vpop.xlane.xlu0 %2189
          %2191 = vmax.xlane.f32.xlu0 %v2156
          %v2192 = vpop.xlane.xlu0 %2191
          %2193 = vmax.xlane.f32.xlu0 %v2157
          %v2194 = vpop.xlane.xlu0 %2193
          %2195 = vmax.xlane.f32.xlu0 %v2158
          %v2196 = vpop.xlane.xlu0 %2195
          %2197 = vmax.xlane.f32.xlu0 %v2159
          %v2198 = vpop.xlane.xlu0 %2197
          %2199 = vmax.xlane.f32.xlu0 %v2160
          %v2200 = vpop.xlane.xlu0 %2199
          %2201 = vmax.xlane.f32.xlu0 %v2161
          %v2202 = vpop.xlane.xlu0 %2201
          %2203 = vmax.xlane.f32.xlu0 %v2162
          %v2204 = vpop.xlane.xlu0 %2203
          %2205 = vmax.xlane.f32.xlu0 %v2163
          %v2206 = vpop.xlane.xlu0 %2205
          %2207 = vmax.xlane.f32.xlu0 %v2164
          %v2208 = vpop.xlane.xlu0 %2207
          %2209 = vmax.xlane.f32.xlu0 %v2165
          %v2210 = vpop.xlane.xlu0 %2209
          %2211 = vmax.xlane.f32.xlu0 %v2166
          %v2212 = vpop.xlane.xlu0 %2211
          %2213 = vmax.xlane.f32.xlu0 %v2167
          %v2214 = vpop.xlane.xlu0 %2213
          %2215 = vmax.xlane.f32.xlu0 %v2168
          %v2216 = vpop.xlane.xlu0 %2215
          %2217 = vmax.xlane.f32.xlu0 %v2169
          %v2218 = vpop.xlane.xlu0 %2217
          %2219 = vmax.xlane.f32.xlu0 %v2170
          %v2220 = vpop.xlane.xlu0 %2219
          %2221 = vmax.xlane.f32.xlu0 %v2171
          %v2222 = vpop.xlane.xlu0 %2221
          %2223 = vmax.xlane.f32.xlu0 %v2172
          %v2224 = vpop.xlane.xlu0 %2223
          %2225 = vmax.xlane.f32.xlu0 %v2173
          %v2226 = vpop.xlane.xlu0 %2225
          %2227 = vmax.xlane.f32.xlu0 %v2174
          %v2228 = vpop.xlane.xlu0 %2227
          %2229 = vmax.xlane.f32.xlu0 %v2175
          %v2230 = vpop.xlane.xlu0 %2229
          %2231 = vmax.xlane.f32.xlu0 %v2176
          %v2232 = vpop.xlane.xlu0 %2231
          %2233 = vmax.xlane.f32.xlu0 %v2177
          %v2234 = vpop.xlane.xlu0 %2233
          %2235 = vmax.xlane.f32.xlu0 %v2178
          %v2236 = vpop.xlane.xlu0 %2235
          %2237 = vmax.xlane.f32.xlu0 %v2179
          %v2238 = vpop.xlane.xlu0 %2237
          %2239 = vmax.xlane.f32.xlu0 %v2180
          %v2240 = vpop.xlane.xlu0 %2239
          %2241 = vmax.xlane.f32.xlu0 %v2181
          %v2242 = vpop.xlane.xlu0 %2241
          %2243 = vmax.xlane.f32.xlu0 %v2182
          %v2244 = vpop.xlane.xlu0 %2243
          %2245 = vmax.xlane.f32.xlu0 %v2183
          %v2246 = vpop.xlane.xlu0 %2245
          %2247 = vmax.xlane.f32.xlu0 %v2184
          %v2248 = vpop.xlane.xlu0 %2247
          %v2249 = vsub.f32 %v2153, %v2186
          %v2250 = vsub.f32 %v2154, %v2188
          %v2251 = vsub.f32 %v2155, %v2190
          %v2252 = vsub.f32 %v2156, %v2192
          %v2253 = vsub.f32 %v2157, %v2194
          %v2254 = vsub.f32 %v2158, %v2196
          %v2255 = vsub.f32 %v2159, %v2198
          %v2256 = vsub.f32 %v2160, %v2200
          %v2257 = vsub.f32 %v2161, %v2202
          %v2258 = vsub.f32 %v2162, %v2204
          %v2259 = vsub.f32 %v2163, %v2206
          %v2260 = vsub.f32 %v2164, %v2208
          %v2261 = vsub.f32 %v2165, %v2210
          %v2262 = vsub.f32 %v2166, %v2212
          %v2263 = vsub.f32 %v2167, %v2214
          %v2264 = vsub.f32 %v2168, %v2216
          %v2265 = vsub.f32 %v2169, %v2218
          %v2266 = vsub.f32 %v2170, %v2220
          %v2267 = vsub.f32 %v2171, %v2222
          %v2268 = vsub.f32 %v2172, %v2224
          %v2269 = vsub.f32 %v2173, %v2226
          %v2270 = vsub.f32 %v2174, %v2228
          %v2271 = vsub.f32 %v2175, %v2230
          %v2272 = vsub.f32 %v2176, %v2232
          %v2273 = vsub.f32 %v2177, %v2234
          %v2274 = vsub.f32 %v2178, %v2236
          %v2275 = vsub.f32 %v2179, %v2238
          %v2276 = vsub.f32 %v2180, %v2240
          %v2277 = vsub.f32 %v2181, %v2242
          %v2278 = vsub.f32 %v2182, %v2244
          %v2279 = vsub.f32 %v2183, %v2246
          %v2280 = vsub.f32 %v2184, %v2248
          %v2281 = vmul.f32 %v2249, 1.442695
          %v2282 = vpow.pop %v2281
          %v2283 = vmul.f32 %v2250, 1.442695
          %v2284 = vpow.pop %v2283
          %v2285 = vmul.f32 %v2251, 1.442695
          %v2286 = vpow.pop %v2285
          %v2287 = vmul.f32 %v2252, 1.442695
          %v2288 = vpow.pop %v2287
          %v2289 = vmul.f32 %v2253, 1.442695
          %v2290 = vpow.pop %v2289
          %v2291 = vmul.f32 %v2254, 1.442695
          %v2292 = vpow.pop %v2291
          %v2293 = vmul.f32 %v2255, 1.442695
          %v2294 = vpow.pop %v2293
          %v2295 = vmul.f32 %v2256, 1.442695
          %v2296 = vpow.pop %v2295
          %v2297 = vmul.f32 %v2257, 1.442695
          %v2298 = vpow.pop %v2297
          %v2299 = vmul.f32 %v2258, 1.442695
          %v2300 = vpow.pop %v2299
          %v2301 = vmul.f32 %v2259, 1.442695
          %v2302 = vpow.pop %v2301
          %v2303 = vmul.f32 %v2260, 1.442695
          %v2304 = vpow.pop %v2303
          %v2305 = vmul.f32 %v2261, 1.442695
          %v2306 = vpow.pop %v2305
          %v2307 = vmul.f32 %v2262, 1.442695
          %v2308 = vpow.pop %v2307
          %v2309 = vmul.f32 %v2263, 1.442695
          %v2310 = vpow.pop %v2309
          %v2311 = vmul.f32 %v2264, 1.442695
          %v2312 = vpow.pop %v2311
          %v2313 = vmul.f32 %v2265, 1.442695
          %v2314 = vpow.pop %v2313
          %v2315 = vmul.f32 %v2266, 1.442695
          %v2316 = vpow.pop %v2315
          %v2317 = vmul.f32 %v2267, 1.442695
          %v2318 = vpow.pop %v2317
          %v2319 = vmul.f32 %v2268, 1.442695
          %v2320 = vpow.pop %v2319
          %v2321 = vmul.f32 %v2269, 1.442695
          %v2322 = vpow.pop %v2321
          %v2323 = vmul.f32 %v2270, 1.442695
          %v2324 = vpow.pop %v2323
          %v2325 = vmul.f32 %v2271, 1.442695
          %v2326 = vpow.pop %v2325
          %v2327 = vmul.f32 %v2272, 1.442695
          %v2328 = vpow.pop %v2327
          %v2329 = vmul.f32 %v2273, 1.442695
          %v2330 = vpow.pop %v2329
          %v2331 = vmul.f32 %v2274, 1.442695
          %v2332 = vpow.pop %v2331
          %v2333 = vmul.f32 %v2275, 1.442695
          %v2334 = vpow.pop %v2333
          %v2335 = vmul.f32 %v2276, 1.442695
          %v2336 = vpow.pop %v2335
          %v2337 = vmul.f32 %v2277, 1.442695
          %v2338 = vpow.pop %v2337
          %v2339 = vmul.f32 %v2278, 1.442695
          %v2340 = vpow.pop %v2339
          %v2341 = vmul.f32 %v2279, 1.442695
          %v2342 = vpow.pop %v2341
          %v2343 = vmul.f32 %v2280, 1.442695
          %v2344 = vpow.pop %v2343
          %2345 = vadd.xlane.f32.xlu0 %v2282
          %v2346 = vpop.xlane.xlu0 %2345
          %2347 = vadd.xlane.f32.xlu0 %v2284
          %v2348 = vpop.xlane.xlu0 %2347
          %2349 = vadd.xlane.f32.xlu0 %v2286
          %v2350 = vpop.xlane.xlu0 %2349
          %2351 = vadd.xlane.f32.xlu0 %v2288
          %v2352 = vpop.xlane.xlu0 %2351
          %2353 = vadd.xlane.f32.xlu0 %v2290
          %v2354 = vpop.xlane.xlu0 %2353
          %2355 = vadd.xlane.f32.xlu0 %v2292
          %v2356 = vpop.xlane.xlu0 %2355
          %2357 = vadd.xlane.f32.xlu0 %v2294
          %v2358 = vpop.xlane.xlu0 %2357
          %2359 = vadd.xlane.f32.xlu0 %v2296
          %v2360 = vpop.xlane.xlu0 %2359
          %2361 = vadd.xlane.f32.xlu0 %v2298
          %v2362 = vpop.xlane.xlu0 %2361
          %2363 = vadd.xlane.f32.xlu0 %v2300
          %v2364 = vpop.xlane.xlu0 %2363
          %2365 = vadd.xlane.f32.xlu0 %v2302
          %v2366 = vpop.xlane.xlu0 %2365
          %2367 = vadd.xlane.f32.xlu0 %v2304
          %v2368 = vpop.xlane.xlu0 %2367
          %2369 = vadd.xlane.f32.xlu0 %v2306
          %v2370 = vpop.xlane.xlu0 %2369
          %2371 = vadd.xlane.f32.xlu0 %v2308
          %v2372 = vpop.xlane.xlu0 %2371
          %2373 = vadd.xlane.f32.xlu0 %v2310
          %v2374 = vpop.xlane.xlu0 %2373
          %2375 = vadd.xlane.f32.xlu0 %v2312
          %v2376 = vpop.xlane.xlu0 %2375
          %2377 = vadd.xlane.f32.xlu0 %v2314
          %v2378 = vpop.xlane.xlu0 %2377
          %2379 = vadd.xlane.f32.xlu0 %v2316
          %v2380 = vpop.xlane.xlu0 %2379
          %2381 = vadd.xlane.f32.xlu0 %v2318
          %v2382 = vpop.xlane.xlu0 %2381
          %2383 = vadd.xlane.f32.xlu0 %v2320
          %v2384 = vpop.xlane.xlu0 %2383
          %2385 = vadd.xlane.f32.xlu0 %v2322
          %v2386 = vpop.xlane.xlu0 %2385
          %2387 = vadd.xlane.f32.xlu0 %v2324
          %v2388 = vpop.xlane.xlu0 %2387
          %2389 = vadd.xlane.f32.xlu0 %v2326
          %v2390 = vpop.xlane.xlu0 %2389
          %2391 = vadd.xlane.f32.xlu0 %v2328
          %v2392 = vpop.xlane.xlu0 %2391
          %2393 = vadd.xlane.f32.xlu0 %v2330
          %v2394 = vpop.xlane.xlu0 %2393
          %2395 = vadd.xlane.f32.xlu0 %v2332
          %v2396 = vpop.xlane.xlu0 %2395
          %2397 = vadd.xlane.f32.xlu0 %v2334
          %v2398 = vpop.xlane.xlu0 %2397
          %2399 = vadd.xlane.f32.xlu0 %v2336
          %v2400 = vpop.xlane.xlu0 %2399
          %2401 = vadd.xlane.f32.xlu0 %v2338
          %v2402 = vpop.xlane.xlu0 %2401
          %2403 = vadd.xlane.f32.xlu0 %v2340
          %v2404 = vpop.xlane.xlu0 %2403
          %2405 = vadd.xlane.f32.xlu0 %v2342
          %v2406 = vpop.xlane.xlu0 %2405
          %2407 = vadd.xlane.f32.xlu0 %v2344
          %v2408 = vpop.xlane.xlu0 %2407
          %v2409 = vlog2.pop %v2346
          %v2410 = vmul.f32 %v2409, 0.6931472
          %v2411 = vlog2.pop %v2348
          %v2412 = vmul.f32 %v2411, 0.6931472
          %v2413 = vlog2.pop %v2350
          %v2414 = vmul.f32 %v2413, 0.6931472
          %v2415 = vlog2.pop %v2352
          %v2416 = vmul.f32 %v2415, 0.6931472
          %v2417 = vlog2.pop %v2354
          %v2418 = vmul.f32 %v2417, 0.6931472
          %v2419 = vlog2.pop %v2356
          %v2420 = vmul.f32 %v2419, 0.6931472
          %v2421 = vlog2.pop %v2358
          %v2422 = vmul.f32 %v2421, 0.6931472
          %v2423 = vlog2.pop %v2360
          %v2424 = vmul.f32 %v2423, 0.6931472
          %v2425 = vlog2.pop %v2362
          %v2426 = vmul.f32 %v2425, 0.6931472
          %v2427 = vlog2.pop %v2364
          %v2428 = vmul.f32 %v2427, 0.6931472
          %v2429 = vlog2.pop %v2366
          %v2430 = vmul.f32 %v2429, 0.6931472
          %v2431 = vlog2.pop %v2368
          %v2432 = vmul.f32 %v2431, 0.6931472
          %v2433 = vlog2.pop %v2370
          %v2434 = vmul.f32 %v2433, 0.6931472
          %v2435 = vlog2.pop %v2372
          %v2436 = vmul.f32 %v2435, 0.6931472
          %v2437 = vlog2.pop %v2374
          %v2438 = vmul.f32 %v2437, 0.6931472
          %v2439 = vlog2.pop %v2376
          %v2440 = vmul.f32 %v2439, 0.6931472
          %v2441 = vlog2.pop %v2378
          %v2442 = vmul.f32 %v2441, 0.6931472
          %v2443 = vlog2.pop %v2380
          %v2444 = vmul.f32 %v2443, 0.6931472
          %v2445 = vlog2.pop %v2382
          %v2446 = vmul.f32 %v2445, 0.6931472
          %v2447 = vlog2.pop %v2384
          %v2448 = vmul.f32 %v2447, 0.6931472
          %v2449 = vlog2.pop %v2386
          %v2450 = vmul.f32 %v2449, 0.6931472
          %v2451 = vlog2.pop %v2388
          %v2452 = vmul.f32 %v2451, 0.6931472
          %v2453 = vlog2.pop %v2390
          %v2454 = vmul.f32 %v2453, 0.6931472
          %v2455 = vlog2.pop %v2392
          %v2456 = vmul.f32 %v2455, 0.6931472
          %v2457 = vlog2.pop %v2394
          %v2458 = vmul.f32 %v2457, 0.6931472
          %v2459 = vlog2.pop %v2396
          %v2460 = vmul.f32 %v2459, 0.6931472
          %v2461 = vlog2.pop %v2398
          %v2462 = vmul.f32 %v2461, 0.6931472
          %v2463 = vlog2.pop %v2400
          %v2464 = vmul.f32 %v2463, 0.6931472
          %v2465 = vlog2.pop %v2402
          %v2466 = vmul.f32 %v2465, 0.6931472
          %v2467 = vlog2.pop %v2404
          %v2468 = vmul.f32 %v2467, 0.6931472
          %v2469 = vlog2.pop %v2406
          %v2470 = vmul.f32 %v2469, 0.6931472
          %v2471 = vlog2.pop %v2408
          %v2472 = vmul.f32 %v2471, 0.6931472
          %v2473 = vsub.f32 %v2249, %v2410
          %v2474 = vsub.f32 %v2250, %v2412
          %v2475 = vsub.f32 %v2251, %v2414
          %v2476 = vsub.f32 %v2252, %v2416
          %v2477 = vsub.f32 %v2253, %v2418
          %v2478 = vsub.f32 %v2254, %v2420
          %v2479 = vsub.f32 %v2255, %v2422
          %v2480 = vsub.f32 %v2256, %v2424
          %v2481 = vsub.f32 %v2257, %v2426
          %v2482 = vsub.f32 %v2258, %v2428
          %v2483 = vsub.f32 %v2259, %v2430
          %v2484 = vsub.f32 %v2260, %v2432
          %v2485 = vsub.f32 %v2261, %v2434
          %v2486 = vsub.f32 %v2262, %v2436
          %v2487 = vsub.f32 %v2263, %v2438
          %v2488 = vsub.f32 %v2264, %v2440
          %v2489 = vsub.f32 %v2265, %v2442
          %v2490 = vsub.f32 %v2266, %v2444
          %v2491 = vsub.f32 %v2267, %v2446
          %v2492 = vsub.f32 %v2268, %v2448
          %v2493 = vsub.f32 %v2269, %v2450
          %v2494 = vsub.f32 %v2270, %v2452
          %v2495 = vsub.f32 %v2271, %v2454
          %v2496 = vsub.f32 %v2272, %v2456
          %v2497 = vsub.f32 %v2273, %v2458
          %v2498 = vsub.f32 %v2274, %v2460
          %v2499 = vsub.f32 %v2275, %v2462
          %v2500 = vsub.f32 %v2276, %v2464
          %v2501 = vsub.f32 %v2277, %v2466
          %v2502 = vsub.f32 %v2278, %v2468
          %v2503 = vsub.f32 %v2279, %v2470
          %v2504 = vsub.f32 %v2280, %v2472
          %2505 = vst [vmem:[#allocation11] sm:$0xff] %v2473
          %2506 = vst [vmem:[#allocation11 + $0x8] sm:$0xff] %v2474
          %2507 = vst [vmem:[#allocation11 + $0x10] sm:$0xff] %v2475
          %2508 = vst [vmem:[#allocation11 + $0x18] sm:$0xff] %v2476
          %2509 = vst [vmem:[#allocation11 + $0x20] sm:$0xff] %v2477
          %2510 = vst [vmem:[#allocation11 + $0x28] sm:$0xff] %v2478
          %2511 = vst [vmem:[#allocation11 + $0x30] sm:$0xff] %v2479
          %2512 = vst [vmem:[#allocation11 + $0x38] sm:$0xff] %v2480
          %2513 = vst [vmem:[#allocation11 + $0x40] sm:$0xff] %v2481
          %2514 = vst [vmem:[#allocation11 + $0x48] sm:$0xff] %v2482
          %2515 = vst [vmem:[#allocation11 + $0x50] sm:$0xff] %v2483
          %2516 = vst [vmem:[#allocation11 + $0x58] sm:$0xff] %v2484
          %2517 = vst [vmem:[#allocation11 + $0x60] sm:$0xff] %v2485
          %2518 = vst [vmem:[#allocation11 + $0x68] sm:$0xff] %v2486
          %2519 = vst [vmem:[#allocation11 + $0x70] sm:$0xff] %v2487
          %2520 = vst [vmem:[#allocation11 + $0x78] sm:$0xff] %v2488
          %2521 = vst [vmem:[#allocation11 + $0x80] sm:$0xff] %v2489
          %2522 = vst [vmem:[#allocation11 + $0x88] sm:$0xff] %v2490
          %2523 = vst [vmem:[#allocation11 + $0x90] sm:$0xff] %v2491
          %2524 = vst [vmem:[#allocation11 + $0x98] sm:$0xff] %v2492
          %2525 = vst [vmem:[#allocation11 + $0xa0] sm:$0xff] %v2493
          %2526 = vst [vmem:[#allocation11 + $0xa8] sm:$0xff] %v2494
          %2527 = vst [vmem:[#allocation11 + $0xb0] sm:$0xff] %v2495
          %2528 = vst [vmem:[#allocation11 + $0xb8] sm:$0xff] %v2496
          %2529 = vst [vmem:[#allocation11 + $0xc0] sm:$0xff] %v2497
          %2530 = vst [vmem:[#allocation11 + $0xc8] sm:$0xff] %v2498
          %2531 = vst [vmem:[#allocation11 + $0xd0] sm:$0xff] %v2499
          %2532 = vst [vmem:[#allocation11 + $0xd8] sm:$0xff] %v2500
          %2533 = vst [vmem:[#allocation11 + $0xe0] sm:$0xff] %v2501
          %2534 = vst [vmem:[#allocation11 + $0xe8] sm:$0xff] %v2502
          %2535 = vst [vmem:[#allocation11 + $0xf0] sm:$0xff] %v2503
          %2536 = vst [vmem:[#allocation11 + $0xf8] sm:$0xff] %v2504
        $region84: #{tpu_custom_call.1} parent=43 // pred_fallthru
          _
        // Predicated region
        $region85: #{tpu_custom_call.1} parent=43 // pred_check
          %p2537 = pneg %p188
        $region86: #{tpu_custom_call.1} parent=43 // pred_check_branch
          %2539 = sbr.rel (%p2537) target = $region88
        $region87: #{tpu_custom_call.1} parent=43 // pred_region
          %s2541 = ssub.s32 4096, 4096
          %2542 = vsyncadd [#allocation5], %s2541
          %s2543 = sshll.u32 [#allocation11], 4
          %s2544 = int_to_ptr.vmem [resolvable:$true] %s2543
          %2549 = dma.vmem_to_hbm [thread:$0]  %s2544, 4096, %s6, [#allocation5], 128, 128, 8
        $region88: #{tpu_custom_call.1} parent=43 // pred_fallthru
          _
        // Predicated region
        $region89: #{tpu_custom_call.1} parent=43 // pred_check
          %p2550 = pneg %p188
        $region90: #{tpu_custom_call.1} parent=43 // pred_check_branch
          %2552 = sbr.rel (%p2550) target = $region92
        $region91: #{tpu_custom_call.1} parent=43 // pred_region
          %2553 = dma.done [#allocation5], 4096
        $region92: #{tpu_custom_call.1} parent=43 // pred_fallthru
          _
      $region44: #{tpu_custom_call.1} parent=5 // pred_fallthru
        _
      %p2554 = scmp.le.s32.totalorder 2, %s18
      // Predicated region
      $region93: #{tpu_custom_call.1} parent=5 // pred_check
        %p2555 = pneg %p2554
      $region94: #{tpu_custom_call.1} parent=5 // pred_check_branch
        %2557 = sbr.rel (%p2555) target = $region96
      $region95: #{tpu_custom_call.1} parent=5 // pred_region
        %s2558 = ssub.s32 %s18, 2
      $region96: #{tpu_custom_call.1} parent=5 // pred_fallthru
        _
    $region6: #{tpu_custom_call.1} parent=1 // loop_footer
      %s22 = sadd.s32 1, %s18
    $region7: #{tpu_custom_call.1} parent=1 // loop_footer_branch
      %17 = sbr.rel target = $region3
    $region8: #{tpu_custom_call.1} parent=1 // loop_exit
      _
    %2559 = vsyncpa [#allocation4], 1
    %s2560 = scalar_lea.sflag [#allocation4], 1
    %2561 = vsyncpa %s2560, 1
    %2562 = vsyncpa [#allocation7], 1
    %2563 = vsyncpa [#allocation10], 1
    %2564 = vsyncpa [#allocation5], 1
    %s2565 = scalar_lea.sflag [#allocation5], 1
    %2566 = vsyncpa %s2565, 1

</llo_original>
